<compile_context>
chip_gen: v5e
topology: v5e:2x2
jax: 0.10.0
libtpu: 0.0.40
codegen_flags: <defaults>
</compile_context>

<pallas_src>
import functools

import jax
import jax.numpy as jnp
from jax.experimental import pallas as pl
from jax.experimental.pallas import tpu as pltpu


# ----------------------------- fused Pallas kernel -----------------------------


def _fused_block_kernel(
    x_ref, ea_ref, src_row_ref, src_col_ref, dst_col_ref,
    ew1m_ref, ew1d_ref, ew1a_ref, eb1_ref, ew2_ref, eb2_ref,
    nw1x_ref, nw1a_ref, nb1_ref, nw2_ref, nb2_ref,
    gamma_ref, beta_ref,
    xout_ref, eout_ref,
):
    x = x_ref[...]      # (N, F) float32
    ea = ea_ref[...]    # (E, De) float32
    n = x.shape[0]
    e = ea.shape[0]

    # --- selection matrices built in-register (never touch HBM) ---
    # gather matrices  G[e, v] = 1.0 iff idx[e] == v          -> (E, N)
    node_ids_en = jax.lax.broadcasted_iota(jnp.int32, (e, n), 1)
    g_src = (node_ids_en == src_col_ref[...]).astype(jnp.float32)
    g_dst = (node_ids_en == dst_col_ref[...]).astype(jnp.float32)
    # scatter matrix   S[v, e] = 1.0 iff src[e] == v          -> (N, E)
    node_ids_ne = jax.lax.broadcasted_iota(jnp.int32, (n, e), 0)
    s_src = (node_ids_ne == src_row_ref[...]).astype(jnp.float32)

    # --- ProcessorLayer: edge MLP on messages ---
    x_j = jnp.dot(g_src, x, preferred_element_type=jnp.float32)    # x[edge_index[0]]
    x_i = jnp.dot(g_dst, x, preferred_element_type=jnp.float32)    # x[edge_index[1]]
    mean_ij = (x_i + x_j) * 0.5
    diff_ij = jnp.abs(x_i - x_j) * 0.5
    # split-weight form of cat[(xi+xj)/2, |xi-xj|/2, ea] @ W1
    h_e = (
        jnp.dot(mean_ij, ew1m_ref[...], preferred_element_type=jnp.float32)
        + jnp.dot(diff_ij, ew1d_ref[...], preferred_element_type=jnp.float32)
        + jnp.dot(ea, ew1a_ref[...], preferred_element_type=jnp.float32)
        + eb1_ref[...]
    )
    h_e = jnp.maximum(h_e, 0.0)
    upd_edges = jnp.dot(h_e, ew2_ref[...], preferred_element_type=jnp.float32) + eb2_ref[...]

    # --- scatter-sum over edge_index[0] (one-hot matmul on the MXU) ---
    agg = jnp.dot(s_src, upd_edges, preferred_element_type=jnp.float32)   # (N, De)

    # --- node MLP (ends with ReLU; the block-level act ReLU is idempotent on top) ---
    h_n = (
        jnp.dot(x, nw1x_ref[...], preferred_element_type=jnp.float32)
        + jnp.dot(agg, nw1a_ref[...], preferred_element_type=jnp.float32)
        + nb1_ref[...]
    )
    h_n = jnp.maximum(h_n, 0.0)
    xn = jnp.maximum(
        jnp.dot(h_n, nw2_ref[...], preferred_element_type=jnp.float32) + nb2_ref[...], 0.0
    )

    # --- SmoothingLayer message: (x_i + x_j) / 2 (these are the returned edge features) ---
    xn_j = jnp.dot(g_src, xn, preferred_element_type=jnp.float32)
    xn_i = jnp.dot(g_dst, xn, preferred_element_type=jnp.float32)
    edge_out = (xn_i + xn_j) * 0.5
    eout_ref[...] = edge_out

    # --- scatter-mean: sum via one-hot matmul, normalize AFTER the reduction ---
    summed = jnp.dot(s_src, edge_out, preferred_element_type=jnp.float32)   # (N, F)
    counts = jnp.sum(s_src, axis=1, keepdims=True)                          # (N, 1)
    x_smooth = summed / jnp.maximum(counts, 1.0)

    # --- BatchNorm1d (training-mode batch stats, biased variance, eps=1e-5), one pass ---
    mu = jnp.mean(x_smooth, axis=0, keepdims=True)
    ex2 = jnp.mean(x_smooth * x_smooth, axis=0, keepdims=True)
    var = ex2 - mu * mu
    inv = jax.lax.rsqrt(var + 1e-5)
    xout_ref[...] = (x_smooth - mu) * inv * gamma_ref[...] + beta_ref[...]


# ----------------------------- wrapper -----------------------------


def flow_gnn_bn_block(params, x, edge_index, edge_attr,
                      skip_connec=None, skip_connec_ed=None):
    """FlowGNN_BN_block.forward with batchnorm=True, act=True, msg=False, fc_skipcon=False.

    Returns (x_out (N, node_dims), edge_out (E, node_dims)); edge_out is the SmoothingLayer
    message, exactly as the PyTorch module returns it.
    """
    if skip_connec is not None:
        x = x + skip_connec
    if skip_connec_ed is not None:
        edge_attr = edge_attr + skip_connec_ed
    # TODO(synk): skip_info / fc_skipconnec concat paths and MessageNorm (msg=True) are not
    # exercised by this config and are not implemented.

    n, f = x.shape
    e, de = edge_attr.shape

    src = edge_index[0].astype(jnp.int32)
    dst = edge_index[1].astype(jnp.int32)
    src_row = src.reshape(1, e)   # broadcast along sublanes -> scatter matrix (N, E)
    src_col = src.reshape(e, 1)   # broadcast along lanes    -> gather matrix (E, N)
    dst_col = dst.reshape(e, 1)

    # pre-split the concatenation weights outside the kernel
    ew1 = params["edge_w1"]
    ew1m, ew1d, ew1a = ew1[:f], ew1[f:2 * f], ew1[2 * f:]
    nw1 = params["node_w1"]
    nw1x, nw1a = nw1[:f], nw1[f:]

    vmem = pl.BlockSpec(memory_space=pltpu.MemorySpace.VMEM)
    x_out, edge_out = pl.pallas_call(
        _fused_block_kernel,
        out_shape=(
            jax.ShapeDtypeStruct((n, f), jnp.float32),
            jax.ShapeDtypeStruct((e, f), jnp.float32),
        ),
        in_specs=[vmem] * 18,
        out_specs=(vmem, vmem),
    )(
        x, edge_attr, src_row, src_col, dst_col,
        ew1m, ew1d, ew1a, params["edge_b1"], params["edge_w2"], params["edge_b2"],
        nw1x, nw1a, params["node_b1"], params["node_w2"], params["node_b2"],
        params["bn_gamma"].reshape(1, -1), params["bn_beta"].reshape(1, -1),
    )
    return x_out, edge_out


# ----------------------------- params & pure-JAX reference -----------------------------


def init_params(key, node_dims, edge_dims, hidden_size):
    """Deterministic parameter init mirroring nn.Linear defaults (uniform +/- 1/sqrt(fan_in))."""

    def linear(k, fan_in, fan_out):
        kw, kb = jax.random.split(k)
        bound = 1.0 / jnp.sqrt(fan_in)
        w = jax.random.uniform(kw, (fan_in, fan_out), jnp.float32, -bound, bound)
        b = jax.random.uniform(kb, (1, fan_out), jnp.float32, -bound, bound)
        return w, b

    k1, k2, k3, k4 = jax.random.split(key, 4)
    p = {}
    p["edge_w1"], p["edge_b1"] = linear(k1, 2 * node_dims + edge_dims, hidden_size)
    p["edge_w2"], p["edge_b2"] = linear(k2, hidden_size, edge_dims)
    p["node_w1"], p["node_b1"] = linear(k3, node_dims + edge_dims, hidden_size)
    p["node_w2"], p["node_b2"] = linear(k4, hidden_size, node_dims)
    p["bn_gamma"] = 1.0 + 0.1 * jnp.arange(node_dims, dtype=jnp.float32)
    p["bn_beta"] = 0.05 * jnp.arange(node_dims, dtype=jnp.float32)
    return p


def flow_gnn_bn_block_ref(params, x, edge_index, edge_attr):
    """Plain-JAX reference of the same forward pass (for a tolerance check)."""
    n = x.shape[0]
    src, dst = edge_index[0], edge_index[1]
    x_j, x_i = x[src], x[dst]
    cat = jnp.concatenate([(x_i + x_j) / 2, jnp.abs(x_i - x_j) / 2, edge_attr], axis=1)
    h = jax.nn.relu(cat @ params["edge_w1"] + params["edge_b1"])
    upd_edges = h @ params["edge_w2"] + params["edge_b2"]
    agg = jax.ops.segment_sum(upd_edges, src, num_segments=n)
    h2 = jax.nn.relu(jnp.concatenate([x, agg], axis=1) @ params["node_w1"] + params["node_b1"])
    xn = jax.nn.relu(h2 @ params["node_w2"] + params["node_b2"])
    xn = jax.nn.relu(xn)  # block-level act (idempotent)
    edge_out = (xn[dst] + xn[src]) / 2
    summed = jax.ops.segment_sum(edge_out, src, num_segments=n)
    counts = jax.ops.segment_sum(jnp.ones((edge_out.shape[0],), jnp.float32), src,
                                 num_segments=n)[:, None]
    x_smooth = summed / jnp.maximum(counts, 1.0)
    mu = x_smooth.mean(0, keepdims=True)
    var = ((x_smooth - mu) ** 2).mean(0, keepdims=True)
    x_out = (x_smooth - mu) / jnp.sqrt(var + 1e-5) * params["bn_gamma"] + params["bn_beta"]
    return x_out, edge_out


# ----------------------------- demo -----------------------------

if __name__ == "__main__":
    N, E = 64, 128
    NODE_DIMS, EDGE_DIMS, HIDDEN = 8, 8, 32

    key = jax.random.PRNGKey(0)
    kx, ke, ks, kd, kp = jax.random.split(key, 5)

    x = jax.random.normal(kx, (N, NODE_DIMS), jnp.float32)
    edge_attr = jax.random.normal(ke, (E, EDGE_DIMS), jnp.float32)
    # every node appears at least once as a source so the scatter covers all N nodes
    src = jnp.concatenate(
        [jnp.arange(N, dtype=jnp.int32), jax.random.randint(ks, (E - N,), 0, N, jnp.int32)]
    )
    dst = jax.random.randint(kd, (E,), 0, N, jnp.int32)
    edge_index = jnp.stack([src, dst], axis=0)

    params = init_params(kp, NODE_DIMS, EDGE_DIMS, HIDDEN)

    fwd = jax.jit(functools.partial(flow_gnn_bn_block, params))
    x_out, edge_out = fwd(x, edge_index, edge_attr)
    jax.block_until_ready((x_out, edge_out))

    x_ref, e_ref = flow_gnn_bn_block_ref(params, x, edge_index, edge_attr)

    assert x_out.shape == (N, NODE_DIMS)
    assert edge_out.shape == (E, NODE_DIMS)
    assert jnp.all(jnp.isfinite(x_out)) and jnp.all(jnp.isfinite(edge_out))
    assert jnp.allclose(x_out, x_ref, atol=5e-3, rtol=5e-3)
    assert jnp.allclose(edge_out, e_ref, atol=5e-3, rtol=5e-3)
    print("KERNEL_OK")
</pallas_src>

<mosaic_0001>
module attributes {stable_mosaic.version = 11 : i64} {
  func.func @_fused_block_kernel(%arg0: memref<64x8xf32, #tpu.memory_space<vmem>>, %arg1: memref<128x8xf32, #tpu.memory_space<vmem>>, %arg2: memref<1x128xi32, #tpu.memory_space<vmem>>, %arg3: memref<128x1xi32, #tpu.memory_space<vmem>>, %arg4: memref<128x1xi32, #tpu.memory_space<vmem>>, %arg5: memref<8x32xf32, #tpu.memory_space<vmem>>, %arg6: memref<8x32xf32, #tpu.memory_space<vmem>>, %arg7: memref<8x32xf32, #tpu.memory_space<vmem>>, %arg8: memref<1x32xf32, #tpu.memory_space<vmem>>, %arg9: memref<32x8xf32, #tpu.memory_space<vmem>>, %arg10: memref<1x8xf32, #tpu.memory_space<vmem>>, %arg11: memref<8x32xf32, #tpu.memory_space<vmem>>, %arg12: memref<8x32xf32, #tpu.memory_space<vmem>>, %arg13: memref<1x32xf32, #tpu.memory_space<vmem>>, %arg14: memref<32x8xf32, #tpu.memory_space<vmem>>, %arg15: memref<1x8xf32, #tpu.memory_space<vmem>>, %arg16: memref<1x8xf32, #tpu.memory_space<vmem>>, %arg17: memref<1x8xf32, #tpu.memory_space<vmem>>, %arg18: memref<64x8xf32, #tpu.memory_space<vmem>>, %arg19: memref<128x8xf32, #tpu.memory_space<vmem>>) attributes {dimension_semantics = [], scalar_prefetch = 0 : i64, scratch_operands = 0 : i64, tpu.core_type = #tpu.core_type<tc>} {
    %c0 = arith.constant 0 : index
    %c0_0 = arith.constant 0 : index
    %0 = vector.load %arg0[%c0, %c0_0] : memref<64x8xf32, #tpu.memory_space<vmem>>, vector<64x8xf32>
    %c0_1 = arith.constant 0 : index
    %c0_2 = arith.constant 0 : index
    %1 = vector.load %arg1[%c0_1, %c0_2] : memref<128x8xf32, #tpu.memory_space<vmem>>, vector<128x8xf32>
    %2 = tpu.iota {dimensions = array<i32: 1>} : vector<128x64xi32>
    %c0_3 = arith.constant 0 : index
    %c0_4 = arith.constant 0 : index
    %3 = vector.load %arg3[%c0_3, %c0_4] : memref<128x1xi32, #tpu.memory_space<vmem>>, vector<128x1xi32>
    %4 = vector.broadcast %3 : vector<128x1xi32> to vector<128x64xi32>
    %5 = arith.cmpi eq, %2, %4 : vector<128x64xi32>
    %6 = arith.extui %5 : vector<128x64xi1> to vector<128x64xi32>
    %7 = arith.sitofp %6 : vector<128x64xi32> to vector<128x64xf32>
    %c0_5 = arith.constant 0 : index
    %c0_6 = arith.constant 0 : index
    %8 = vector.load %arg4[%c0_5, %c0_6] : memref<128x1xi32, #tpu.memory_space<vmem>>, vector<128x1xi32>
    %9 = vector.broadcast %8 : vector<128x1xi32> to vector<128x64xi32>
    %10 = arith.cmpi eq, %2, %9 : vector<128x64xi32>
    %11 = arith.extui %10 : vector<128x64xi1> to vector<128x64xi32>
    %12 = arith.sitofp %11 : vector<128x64xi32> to vector<128x64xf32>
    %13 = tpu.iota {dimensions = array<i32: 0>} : vector<64x128xi32>
    %c0_7 = arith.constant 0 : index
    %c0_8 = arith.constant 0 : index
    %14 = vector.load %arg2[%c0_7, %c0_8] : memref<1x128xi32, #tpu.memory_space<vmem>>, vector<1x128xi32>
    %15 = vector.broadcast %14 : vector<1x128xi32> to vector<64x128xi32>
    %16 = arith.cmpi eq, %13, %15 : vector<64x128xi32>
    %17 = arith.extui %16 : vector<64x128xi1> to vector<64x128xi32>
    %18 = arith.sitofp %17 : vector<64x128xi32> to vector<64x128xf32>
    %cst = arith.constant dense<0.000000e+00> : vector<128x8xf32>
    %19 = tpu.matmul %7, %0, %cst {dimension_numbers = #tpu.dot_dimension_numbers<[1], [0], [0], [1], [0, 0, 1, 1], [], []>} : vector<128x64xf32>, vector<64x8xf32>, vector<128x8xf32> -> vector<128x8xf32>
    %cst_9 = arith.constant dense<0.000000e+00> : vector<128x8xf32>
    %20 = tpu.matmul %12, %0, %cst_9 {dimension_numbers = #tpu.dot_dimension_numbers<[1], [0], [0], [1], [0, 0, 1, 1], [], []>} : vector<128x64xf32>, vector<64x8xf32>, vector<128x8xf32> -> vector<128x8xf32>
    %21 = arith.addf %20, %19 : vector<128x8xf32>
    %cst_10 = arith.constant 5.000000e-01 : f32
    %22 = vector.broadcast %cst_10 : f32 to vector<128x8xf32>
    %23 = arith.mulf %21, %22 : vector<128x8xf32>
    %24 = arith.subf %20, %19 : vector<128x8xf32>
    %25 = math.absf %24 : vector<128x8xf32>
    %cst_11 = arith.constant 5.000000e-01 : f32
    %26 = vector.broadcast %cst_11 : f32 to vector<128x8xf32>
    %27 = arith.mulf %25, %26 : vector<128x8xf32>
    %c0_12 = arith.constant 0 : index
    %c0_13 = arith.constant 0 : index
    %28 = vector.load %arg5[%c0_12, %c0_13] : memref<8x32xf32, #tpu.memory_space<vmem>>, vector<8x32xf32>
    %cst_14 = arith.constant dense<0.000000e+00> : vector<128x32xf32>
    %29 = tpu.matmul %23, %28, %cst_14 {dimension_numbers = #tpu.dot_dimension_numbers<[1], [0], [0], [1], [0, 0, 1, 1], [], []>} : vector<128x8xf32>, vector<8x32xf32>, vector<128x32xf32> -> vector<128x32xf32>
    %c0_15 = arith.constant 0 : index
    %c0_16 = arith.constant 0 : index
    %30 = vector.load %arg6[%c0_15, %c0_16] : memref<8x32xf32, #tpu.memory_space<vmem>>, vector<8x32xf32>
    %cst_17 = arith.constant dense<0.000000e+00> : vector<128x32xf32>
    %31 = tpu.matmul %27, %30, %cst_17 {dimension_numbers = #tpu.dot_dimension_numbers<[1], [0], [0], [1], [0, 0, 1, 1], [], []>} : vector<128x8xf32>, vector<8x32xf32>, vector<128x32xf32> -> vector<128x32xf32>
    %32 = arith.addf %29, %31 : vector<128x32xf32>
    %c0_18 = arith.constant 0 : index
    %c0_19 = arith.constant 0 : index
    %33 = vector.load %arg7[%c0_18, %c0_19] : memref<8x32xf32, #tpu.memory_space<vmem>>, vector<8x32xf32>
    %cst_20 = arith.constant dense<0.000000e+00> : vector<128x32xf32>
    %34 = tpu.matmul %1, %33, %cst_20 {dimension_numbers = #tpu.dot_dimension_numbers<[1], [0], [0], [1], [0, 0, 1, 1], [], []>} : vector<128x8xf32>, vector<8x32xf32>, vector<128x32xf32> -> vector<128x32xf32>
    %35 = arith.addf %32, %34 : vector<128x32xf32>
    %c0_21 = arith.constant 0 : index
    %c0_22 = arith.constant 0 : index
    %36 = vector.load %arg8[%c0_21, %c0_22] : memref<1x32xf32, #tpu.memory_space<vmem>>, vector<1x32xf32>
    %37 = vector.broadcast %36 : vector<1x32xf32> to vector<128x32xf32>
    %38 = arith.addf %35, %37 : vector<128x32xf32>
    %cst_23 = arith.constant 0.000000e+00 : f32
    %39 = vector.broadcast %cst_23 : f32 to vector<128x32xf32>
    %40 = arith.maximumf %38, %39 : vector<128x32xf32>
    %c0_24 = arith.constant 0 : index
    %c0_25 = arith.constant 0 : index
    %41 = vector.load %arg9[%c0_24, %c0_25] : memref<32x8xf32, #tpu.memory_space<vmem>>, vector<32x8xf32>
    %cst_26 = arith.constant dense<0.000000e+00> : vector<128x8xf32>
    %42 = tpu.matmul %40, %41, %cst_26 {dimension_numbers = #tpu.dot_dimension_numbers<[1], [0], [0], [1], [0, 0, 1, 1], [], []>} : vector<128x32xf32>, vector<32x8xf32>, vector<128x8xf32> -> vector<128x8xf32>
    %c0_27 = arith.constant 0 : index
    %c0_28 = arith.constant 0 : index
    %43 = vector.load %arg10[%c0_27, %c0_28] : memref<1x8xf32, #tpu.memory_space<vmem>>, vector<1x8xf32>
    %44 = vector.broadcast %43 : vector<1x8xf32> to vector<128x8xf32>
    %45 = arith.addf %42, %44 : vector<128x8xf32>
    %cst_29 = arith.constant dense<0.000000e+00> : vector<64x8xf32>
    %46 = tpu.matmul %18, %45, %cst_29 {dimension_numbers = #tpu.dot_dimension_numbers<[1], [0], [0], [1], [0, 0, 1, 1], [], []>} : vector<64x128xf32>, vector<128x8xf32>, vector<64x8xf32> -> vector<64x8xf32>
    %c0_30 = arith.constant 0 : index
    %c0_31 = arith.constant 0 : index
    %47 = vector.load %arg11[%c0_30, %c0_31] : memref<8x32xf32, #tpu.memory_space<vmem>>, vector<8x32xf32>
    %cst_32 = arith.constant dense<0.000000e+00> : vector<64x32xf32>
    %48 = tpu.matmul %0, %47, %cst_32 {dimension_numbers = #tpu.dot_dimension_numbers<[1], [0], [0], [1], [0, 0, 1, 1], [], []>} : vector<64x8xf32>, vector<8x32xf32>, vector<64x32xf32> -> vector<64x32xf32>
    %c0_33 = arith.constant 0 : index
    %c0_34 = arith.constant 0 : index
    %49 = vector.load %arg12[%c0_33, %c0_34] : memref<8x32xf32, #tpu.memory_space<vmem>>, vector<8x32xf32>
    %cst_35 = arith.constant dense<0.000000e+00> : vector<64x32xf32>
    %50 = tpu.matmul %46, %49, %cst_35 {dimension_numbers = #tpu.dot_dimension_numbers<[1], [0], [0], [1], [0, 0, 1, 1], [], []>} : vector<64x8xf32>, vector<8x32xf32>, vector<64x32xf32> -> vector<64x32xf32>
    %51 = arith.addf %48, %50 : vector<64x32xf32>
    %c0_36 = arith.constant 0 : index
    %c0_37 = arith.constant 0 : index
    %52 = vector.load %arg13[%c0_36, %c0_37] : memref<1x32xf32, #tpu.memory_space<vmem>>, vector<1x32xf32>
    %53 = vector.broadcast %52 : vector<1x32xf32> to vector<64x32xf32>
    %54 = arith.addf %51, %53 : vector<64x32xf32>
    %cst_38 = arith.constant 0.000000e+00 : f32
    %55 = vector.broadcast %cst_38 : f32 to vector<64x32xf32>
    %56 = arith.maximumf %54, %55 : vector<64x32xf32>
    %c0_39 = arith.constant 0 : index
    %c0_40 = arith.constant 0 : index
    %57 = vector.load %arg14[%c0_39, %c0_40] : memref<32x8xf32, #tpu.memory_space<vmem>>, vector<32x8xf32>
    %cst_41 = arith.constant dense<0.000000e+00> : vector<64x8xf32>
    %58 = tpu.matmul %56, %57, %cst_41 {dimension_numbers = #tpu.dot_dimension_numbers<[1], [0], [0], [1], [0, 0, 1, 1], [], []>} : vector<64x32xf32>, vector<32x8xf32>, vector<64x8xf32> -> vector<64x8xf32>
    %c0_42 = arith.constant 0 : index
    %c0_43 = arith.constant 0 : index
    %59 = vector.load %arg15[%c0_42, %c0_43] : memref<1x8xf32, #tpu.memory_space<vmem>>, vector<1x8xf32>
    %60 = vector.broadcast %59 : vector<1x8xf32> to vector<64x8xf32>
    %61 = arith.addf %58, %60 : vector<64x8xf32>
    %cst_44 = arith.constant 0.000000e+00 : f32
    %62 = vector.broadcast %cst_44 : f32 to vector<64x8xf32>
    %63 = arith.maximumf %61, %62 : vector<64x8xf32>
    %cst_45 = arith.constant dense<0.000000e+00> : vector<128x8xf32>
    %64 = tpu.matmul %7, %63, %cst_45 {dimension_numbers = #tpu.dot_dimension_numbers<[1], [0], [0], [1], [0, 0, 1, 1], [], []>} : vector<128x64xf32>, vector<64x8xf32>, vector<128x8xf32> -> vector<128x8xf32>
    %cst_46 = arith.constant dense<0.000000e+00> : vector<128x8xf32>
    %65 = tpu.matmul %12, %63, %cst_46 {dimension_numbers = #tpu.dot_dimension_numbers<[1], [0], [0], [1], [0, 0, 1, 1], [], []>} : vector<128x64xf32>, vector<64x8xf32>, vector<128x8xf32> -> vector<128x8xf32>
    %66 = arith.addf %65, %64 : vector<128x8xf32>
    %cst_47 = arith.constant 5.000000e-01 : f32
    %67 = vector.broadcast %cst_47 : f32 to vector<128x8xf32>
    %68 = arith.mulf %66, %67 : vector<128x8xf32>
    %c0_48 = arith.constant 0 : index
    %c0_49 = arith.constant 0 : index
    %69 = vector.load %arg19[%c0_48, %c0_49] : memref<128x8xf32, #tpu.memory_space<vmem>>, vector<128x8xf32>
    tpu.vector_store %arg19[%c0_48, %c0_49], %68 {strides = array<i32>} : memref<128x8xf32, #tpu.memory_space<vmem>>, vector<128x8xf32>,
    %cst_50 = arith.constant dense<0.000000e+00> : vector<64x8xf32>
    %70 = tpu.matmul %18, %68, %cst_50 {dimension_numbers = #tpu.dot_dimension_numbers<[1], [0], [0], [1], [0, 0, 1, 1], [], []>} : vector<64x128xf32>, vector<128x8xf32>, vector<64x8xf32> -> vector<64x8xf32>
    %cst_51 = arith.constant dense<0.000000e+00> : vector<64xf32>
    %71 = vector.multi_reduction <add>, %18, %cst_51 [1] : vector<64x128xf32> to vector<64xf32>
    %72 = vector.shape_cast %71 : vector<64xf32> to vector<64x1xf32>
    %cst_52 = arith.constant 1.000000e+00 : f32
    %73 = vector.broadcast %cst_52 : f32 to vector<64x1xf32>
    %74 = arith.maximumf %72, %73 : vector<64x1xf32>
    %75 = vector.broadcast %74 : vector<64x1xf32> to vector<64x8xf32>
    %76 = arith.divf %70, %75 : vector<64x8xf32>
    %cst_53 = arith.constant dense<0.000000e+00> : vector<8xf32>
    %77 = vector.multi_reduction <add>, %76, %cst_53 [0] : vector<64x8xf32> to vector<8xf32>
    %78 = vector.shape_cast %77 : vector<8xf32> to vector<1x8xf32>
    %cst_54 = arith.constant 6.400000e+01 : f32
    %79 = vector.broadcast %cst_54 : f32 to vector<1x8xf32>
    %80 = arith.divf %78, %79 : vector<1x8xf32>
    %81 = arith.mulf %76, %76 : vector<64x8xf32>
    %cst_55 = arith.constant dense<0.000000e+00> : vector<8xf32>
    %82 = vector.multi_reduction <add>, %81, %cst_55 [0] : vector<64x8xf32> to vector<8xf32>
    %83 = vector.shape_cast %82 : vector<8xf32> to vector<1x8xf32>
    %cst_56 = arith.constant 6.400000e+01 : f32
    %84 = vector.broadcast %cst_56 : f32 to vector<1x8xf32>
    %85 = arith.divf %83, %84 : vector<1x8xf32>
    %86 = arith.mulf %80, %80 : vector<1x8xf32>
    %87 = arith.subf %85, %86 : vector<1x8xf32>
    %cst_57 = arith.constant 9.99999974E-6 : f32
    %88 = vector.broadcast %cst_57 : f32 to vector<1x8xf32>
    %89 = arith.addf %87, %88 : vector<1x8xf32>
    %90 = math.rsqrt %89 : vector<1x8xf32>
    %91 = vector.broadcast %80 : vector<1x8xf32> to vector<64x8xf32>
    %92 = arith.subf %76, %91 : vector<64x8xf32>
    %93 = vector.broadcast %90 : vector<1x8xf32> to vector<64x8xf32>
    %94 = arith.mulf %92, %93 : vector<64x8xf32>
    %c0_58 = arith.constant 0 : index
    %c0_59 = arith.constant 0 : index
    %95 = vector.load %arg16[%c0_58, %c0_59] : memref<1x8xf32, #tpu.memory_space<vmem>>, vector<1x8xf32>
    %96 = vector.broadcast %95 : vector<1x8xf32> to vector<64x8xf32>
    %97 = arith.mulf %94, %96 : vector<64x8xf32>
    %c0_60 = arith.constant 0 : index
    %c0_61 = arith.constant 0 : index
    %98 = vector.load %arg17[%c0_60, %c0_61] : memref<1x8xf32, #tpu.memory_space<vmem>>, vector<1x8xf32>
    %99 = vector.broadcast %98 : vector<1x8xf32> to vector<64x8xf32>
    %100 = arith.addf %97, %99 : vector<64x8xf32>
    %c0_62 = arith.constant 0 : index
    %c0_63 = arith.constant 0 : index
    %101 = vector.load %arg18[%c0_62, %c0_63] : memref<64x8xf32, #tpu.memory_space<vmem>>, vector<64x8xf32>
    tpu.vector_store %arg18[%c0_62, %c0_63], %100 {strides = array<i32>} : memref<64x8xf32, #tpu.memory_space<vmem>>, vector<64x8xf32>,
    return
  }
}

</mosaic_0001>

<llo_original>
// kernel: flow_gnn_bn_block.1
$region0: #{flow_gnn_bn_block.1}
  #allocation0 [shape = 'u32[]', space=smem, size = 0x4, offset = 0x4, fixed_abs, tag = 'smem constant byte address 0x4 - core index']
  #allocation1 [shape = 'u32[72,128]{1,0:T(1,128)}', space=vmem, size = 0x9000, scoped, tag = 'internal scratch']
  %s0 = inlined_call_operand.vmem [shape: f32[64,8], index: 0, kind: input, shape index: {}]
  %s1 = inlined_call_operand.vmem [shape: f32[128,8], index: 1, kind: input, shape index: {}]
  %s2 = inlined_call_operand.vmem [shape: s32[1,128], index: 2, kind: input, shape index: {}]
  %s3 = inlined_call_operand.vmem [shape: s32[128,1], index: 3, kind: input, shape index: {}]
  %s4 = inlined_call_operand.vmem [shape: s32[128,1], index: 4, kind: input, shape index: {}]
  %s5 = inlined_call_operand.vmem [shape: f32[8,32], index: 5, kind: input, shape index: {}]
  %s6 = inlined_call_operand.vmem [shape: f32[8,32], index: 6, kind: input, shape index: {}]
  %s7 = inlined_call_operand.vmem [shape: f32[8,32], index: 7, kind: input, shape index: {}]
  %s8 = inlined_call_operand.vmem [shape: f32[1,32], index: 8, kind: input, shape index: {}]
  %s9 = inlined_call_operand.vmem [shape: f32[32,8], index: 9, kind: input, shape index: {}]
  %s10 = inlined_call_operand.vmem [shape: f32[1,8], index: 10, kind: input, shape index: {}]
  %s11 = inlined_call_operand.vmem [shape: f32[8,32], index: 11, kind: input, shape index: {}]
  %s12 = inlined_call_operand.vmem [shape: f32[8,32], index: 12, kind: input, shape index: {}]
  %s13 = inlined_call_operand.vmem [shape: f32[1,32], index: 13, kind: input, shape index: {}]
  %s14 = inlined_call_operand.vmem [shape: f32[32,8], index: 14, kind: input, shape index: {}]
  %s15 = inlined_call_operand.vmem [shape: f32[1,8], index: 15, kind: input, shape index: {}]
  %s16 = inlined_call_operand.vmem [shape: f32[1,8], index: 16, kind: input, shape index: {}]
  %s17 = inlined_call_operand.vmem [shape: f32[1,8], index: 17, kind: input, shape index: {}]
  %s18 = inlined_call_operand.vmem [shape: f32[64,8], index: 18, kind: output, shape index: {0}]
  %s19 = inlined_call_operand.vmem [shape: f32[128,8], index: 19, kind: output, shape index: {1}]
  %20 = xla_tuple %s18, %s19
  %s21 = sld [smem:[#allocation0]]
  $region90: #{flow_gnn_bn_block.1} parent=0
    _
  %s23 = ssub.s32 1, %s21
  %s24 = scalar_select 0, %s23, %s21
  // Predicated region
  $region2: #{flow_gnn_bn_block.1} parent=0 // pred_check
    _
  $region3: #{flow_gnn_bn_block.1} parent=0 // pred_check_branch
    %26 = sbr.rel (0) target = $region5
  $region4: #{flow_gnn_bn_block.1} parent=0 // pred_region
    _
  $region5: #{flow_gnn_bn_block.1} parent=0 // pred_fallthru
    _
  // Predicated region
  $region6: #{flow_gnn_bn_block.1} parent=0 // pred_check
    _
  $region7: #{flow_gnn_bn_block.1} parent=0 // pred_check_branch
    %28 = sbr.rel (0) target = $region9
  $region8: #{flow_gnn_bn_block.1} parent=0 // pred_region
    _
  $region9: #{flow_gnn_bn_block.1} parent=0 // pred_fallthru
    _
  // Predicated region
  $region10: #{flow_gnn_bn_block.1} parent=0 // pred_check
    _
  $region11: #{flow_gnn_bn_block.1} parent=0 // pred_check_branch
    %30 = sbr.rel (0) target = $region13
  $region12: #{flow_gnn_bn_block.1} parent=0 // pred_region
    _
  $region13: #{flow_gnn_bn_block.1} parent=0 // pred_fallthru
    _
  // Predicated region
  $region14: #{flow_gnn_bn_block.1} parent=0 // pred_check
    _
  $region15: #{flow_gnn_bn_block.1} parent=0 // pred_check_branch
    %32 = sbr.rel (0) target = $region17
  $region16: #{flow_gnn_bn_block.1} parent=0 // pred_region
    _
  $region17: #{flow_gnn_bn_block.1} parent=0 // pred_fallthru
    _
  // Predicated region
  $region18: #{flow_gnn_bn_block.1} parent=0 // pred_check
    _
  $region19: #{flow_gnn_bn_block.1} parent=0 // pred_check_branch
    %34 = sbr.rel (0) target = $region21
  $region20: #{flow_gnn_bn_block.1} parent=0 // pred_region
    _
  $region21: #{flow_gnn_bn_block.1} parent=0 // pred_fallthru
    _
  // Predicated region
  $region22: #{flow_gnn_bn_block.1} parent=0 // pred_check
    _
  $region23: #{flow_gnn_bn_block.1} parent=0 // pred_check_branch
    %36 = sbr.rel (0) target = $region25
  $region24: #{flow_gnn_bn_block.1} parent=0 // pred_region
    _
  $region25: #{flow_gnn_bn_block.1} parent=0 // pred_fallthru
    _
  // Predicated region
  $region26: #{flow_gnn_bn_block.1} parent=0 // pred_check
    _
  $region27: #{flow_gnn_bn_block.1} parent=0 // pred_check_branch
    %38 = sbr.rel (0) target = $region29
  $region28: #{flow_gnn_bn_block.1} parent=0 // pred_region
    _
  $region29: #{flow_gnn_bn_block.1} parent=0 // pred_fallthru
    _
  // Predicated region
  $region30: #{flow_gnn_bn_block.1} parent=0 // pred_check
    _
  $region31: #{flow_gnn_bn_block.1} parent=0 // pred_check_branch
    %40 = sbr.rel (0) target = $region33
  $region32: #{flow_gnn_bn_block.1} parent=0 // pred_region
    _
  $region33: #{flow_gnn_bn_block.1} parent=0 // pred_fallthru
    _
  // Predicated region
  $region34: #{flow_gnn_bn_block.1} parent=0 // pred_check
    _
  $region35: #{flow_gnn_bn_block.1} parent=0 // pred_check_branch
    %42 = sbr.rel (0) target = $region37
  $region36: #{flow_gnn_bn_block.1} parent=0 // pred_region
    _
  $region37: #{flow_gnn_bn_block.1} parent=0 // pred_fallthru
    _
  // Predicated region
  $region38: #{flow_gnn_bn_block.1} parent=0 // pred_check
    _
  $region39: #{flow_gnn_bn_block.1} parent=0 // pred_check_branch
    %44 = sbr.rel (0) target = $region41
  $region40: #{flow_gnn_bn_block.1} parent=0 // pred_region
    _
  $region41: #{flow_gnn_bn_block.1} parent=0 // pred_fallthru
    _
  // Predicated region
  $region42: #{flow_gnn_bn_block.1} parent=0 // pred_check
    _
  $region43: #{flow_gnn_bn_block.1} parent=0 // pred_check_branch
    %46 = sbr.rel (0) target = $region45
  $region44: #{flow_gnn_bn_block.1} parent=0 // pred_region
    _
  $region45: #{flow_gnn_bn_block.1} parent=0 // pred_fallthru
    _
  // Predicated region
  $region46: #{flow_gnn_bn_block.1} parent=0 // pred_check
    _
  $region47: #{flow_gnn_bn_block.1} parent=0 // pred_check_branch
    %48 = sbr.rel (0) target = $region49
  $region48: #{flow_gnn_bn_block.1} parent=0 // pred_region
    _
  $region49: #{flow_gnn_bn_block.1} parent=0 // pred_fallthru
    _
  // Predicated region
  $region50: #{flow_gnn_bn_block.1} parent=0 // pred_check
    _
  $region51: #{flow_gnn_bn_block.1} parent=0 // pred_check_branch
    %50 = sbr.rel (0) target = $region53
  $region52: #{flow_gnn_bn_block.1} parent=0 // pred_region
    _
  $region53: #{flow_gnn_bn_block.1} parent=0 // pred_fallthru
    _
  // Predicated region
  $region54: #{flow_gnn_bn_block.1} parent=0 // pred_check
    _
  $region55: #{flow_gnn_bn_block.1} parent=0 // pred_check_branch
    %52 = sbr.rel (0) target = $region57
  $region56: #{flow_gnn_bn_block.1} parent=0 // pred_region
    _
  $region57: #{flow_gnn_bn_block.1} parent=0 // pred_fallthru
    _
  // Predicated region
  $region58: #{flow_gnn_bn_block.1} parent=0 // pred_check
    _
  $region59: #{flow_gnn_bn_block.1} parent=0 // pred_check_branch
    %54 = sbr.rel (0) target = $region61
  $region60: #{flow_gnn_bn_block.1} parent=0 // pred_region
    _
  $region61: #{flow_gnn_bn_block.1} parent=0 // pred_fallthru
    _
  // Predicated region
  $region62: #{flow_gnn_bn_block.1} parent=0 // pred_check
    _
  $region63: #{flow_gnn_bn_block.1} parent=0 // pred_check_branch
    %56 = sbr.rel (0) target = $region65
  $region64: #{flow_gnn_bn_block.1} parent=0 // pred_region
    _
  $region65: #{flow_gnn_bn_block.1} parent=0 // pred_fallthru
    _
  // Predicated region
  $region66: #{flow_gnn_bn_block.1} parent=0 // pred_check
    _
  $region67: #{flow_gnn_bn_block.1} parent=0 // pred_check_branch
    %58 = sbr.rel (0) target = $region69
  $region68: #{flow_gnn_bn_block.1} parent=0 // pred_region
    _
  $region69: #{flow_gnn_bn_block.1} parent=0 // pred_fallthru
    _
  // Predicated region
  $region70: #{flow_gnn_bn_block.1} parent=0 // pred_check
    _
  $region71: #{flow_gnn_bn_block.1} parent=0 // pred_check_branch
    %60 = sbr.rel (0) target = $region73
  $region72: #{flow_gnn_bn_block.1} parent=0 // pred_region
    _
  $region73: #{flow_gnn_bn_block.1} parent=0 // pred_fallthru
    _
  %v61 = vld [vmem:[%s0] sm:$0xff]
  %v62 = vld [vmem:[%s0 + $0x8] sm:$0xff]
  %v63 = vld [vmem:[%s0 + $0x10] sm:$0xff]
  %v64 = vld [vmem:[%s0 + $0x18] sm:$0xff]
  %v65 = vld [vmem:[%s0 + $0x20] sm:$0xff]
  %v66 = vld [vmem:[%s0 + $0x28] sm:$0xff]
  %v67 = vld [vmem:[%s0 + $0x30] sm:$0xff]
  %v68 = vld [vmem:[%s0 + $0x38] sm:$0xff]
  %v69 = vld [vmem:[%s1] sm:$0xff]
  %v70 = vld [vmem:[%s1 + $0x8] sm:$0xff]
  %v71 = vld [vmem:[%s1 + $0x10] sm:$0xff]
  %v72 = vld [vmem:[%s1 + $0x18] sm:$0xff]
  %v73 = vld [vmem:[%s1 + $0x20] sm:$0xff]
  %v74 = vld [vmem:[%s1 + $0x28] sm:$0xff]
  %v75 = vld [vmem:[%s1 + $0x30] sm:$0xff]
  %v76 = vld [vmem:[%s1 + $0x38] sm:$0xff]
  %v77 = vld [vmem:[%s1 + $0x40] sm:$0xff]
  %v78 = vld [vmem:[%s1 + $0x48] sm:$0xff]
  %v79 = vld [vmem:[%s1 + $0x50] sm:$0xff]
  %v80 = vld [vmem:[%s1 + $0x58] sm:$0xff]
  %v81 = vld [vmem:[%s1 + $0x60] sm:$0xff]
  %v82 = vld [vmem:[%s1 + $0x68] sm:$0xff]
  %v83 = vld [vmem:[%s1 + $0x70] sm:$0xff]
  %v84 = vld [vmem:[%s1 + $0x78] sm:$0xff]
  %v85 = vlaneseq
  %v86 = vand.u32 %v85, 127
  %v87 = vld [vmem:[%s3] sm:$0xff]
  %v88 = vld [vmem:[%s3 + $0x8] sm:$0xff]
  %v89 = vld [vmem:[%s3 + $0x10] sm:$0xff]
  %v90 = vld [vmem:[%s3 + $0x18] sm:$0xff]
  %v91 = vld [vmem:[%s3 + $0x20] sm:$0xff]
  %v92 = vld [vmem:[%s3 + $0x28] sm:$0xff]
  %v93 = vld [vmem:[%s3 + $0x30] sm:$0xff]
  %v94 = vld [vmem:[%s3 + $0x38] sm:$0xff]
  %v95 = vld [vmem:[%s3 + $0x40] sm:$0xff]
  %v96 = vld [vmem:[%s3 + $0x48] sm:$0xff]
  %v97 = vld [vmem:[%s3 + $0x50] sm:$0xff]
  %v98 = vld [vmem:[%s3 + $0x58] sm:$0xff]
  %v99 = vld [vmem:[%s3 + $0x60] sm:$0xff]
  %v100 = vld [vmem:[%s3 + $0x68] sm:$0xff]
  %v101 = vld [vmem:[%s3 + $0x70] sm:$0xff]
  %v102 = vld [vmem:[%s3 + $0x78] sm:$0xff]
  %103 = vset.pattern.permute.xlu0 0
  %104 = vperm.xlu0 %103, %v87
  %v105 = vpop.permute.xlu0 %104
  %106 = vset.pattern.permute.xlu0 0
  %107 = vperm.xlu0 %106, %v88
  %v108 = vpop.permute.xlu0 %107
  %109 = vset.pattern.permute.xlu0 0
  %110 = vperm.xlu0 %109, %v89
  %v111 = vpop.permute.xlu0 %110
  %112 = vset.pattern.permute.xlu0 0
  %113 = vperm.xlu0 %112, %v90
  %v114 = vpop.permute.xlu0 %113
  %115 = vset.pattern.permute.xlu0 0
  %116 = vperm.xlu0 %115, %v91
  %v117 = vpop.permute.xlu0 %116
  %118 = vset.pattern.permute.xlu0 0
  %119 = vperm.xlu0 %118, %v92
  %v120 = vpop.permute.xlu0 %119
  %121 = vset.pattern.permute.xlu0 0
  %122 = vperm.xlu0 %121, %v93
  %v123 = vpop.permute.xlu0 %122
  %124 = vset.pattern.permute.xlu0 0
  %125 = vperm.xlu0 %124, %v94
  %v126 = vpop.permute.xlu0 %125
  %127 = vset.pattern.permute.xlu0 0
  %128 = vperm.xlu0 %127, %v95
  %v129 = vpop.permute.xlu0 %128
  %130 = vset.pattern.permute.xlu0 0
  %131 = vperm.xlu0 %130, %v96
  %v132 = vpop.permute.xlu0 %131
  %133 = vset.pattern.permute.xlu0 0
  %134 = vperm.xlu0 %133, %v97
  %v135 = vpop.permute.xlu0 %134
  %136 = vset.pattern.permute.xlu0 0
  %137 = vperm.xlu0 %136, %v98
  %v138 = vpop.permute.xlu0 %137
  %139 = vset.pattern.permute.xlu0 0
  %140 = vperm.xlu0 %139, %v99
  %v141 = vpop.permute.xlu0 %140
  %142 = vset.pattern.permute.xlu0 0
  %143 = vperm.xlu0 %142, %v100
  %v144 = vpop.permute.xlu0 %143
  %145 = vset.pattern.permute.xlu0 0
  %146 = vperm.xlu0 %145, %v101
  %v147 = vpop.permute.xlu0 %146
  %148 = vset.pattern.permute.xlu0 0
  %149 = vperm.xlu0 %148, %v102
  %v150 = vpop.permute.xlu0 %149
  %vm151 = vcmp.eq.s32.totalorder %v86, %v105
  %vm152 = vcmp.eq.s32.totalorder %v86, %v108
  %vm153 = vcmp.eq.s32.totalorder %v86, %v111
  %vm154 = vcmp.eq.s32.totalorder %v86, %v114
  %vm155 = vcmp.eq.s32.totalorder %v86, %v117
  %vm156 = vcmp.eq.s32.totalorder %v86, %v120
  %vm157 = vcmp.eq.s32.totalorder %v86, %v123
  %vm158 = vcmp.eq.s32.totalorder %v86, %v126
  %vm159 = vcmp.eq.s32.totalorder %v86, %v129
  %vm160 = vcmp.eq.s32.totalorder %v86, %v132
  %vm161 = vcmp.eq.s32.totalorder %v86, %v135
  %vm162 = vcmp.eq.s32.totalorder %v86, %v138
  %vm163 = vcmp.eq.s32.totalorder %v86, %v141
  %vm164 = vcmp.eq.s32.totalorder %v86, %v144
  %vm165 = vcmp.eq.s32.totalorder %v86, %v147
  %vm166 = vcmp.eq.s32.totalorder %v86, %v150
  %v167 = vsel %vm151, 1, 0
  %v168 = vsel %vm152, 1, 0
  %v169 = vsel %vm153, 1, 0
  %v170 = vsel %vm154, 1, 0
  %v171 = vsel %vm155, 1, 0
  %v172 = vsel %vm156, 1, 0
  %v173 = vsel %vm157, 1, 0
  %v174 = vsel %vm158, 1, 0
  %v175 = vsel %vm159, 1, 0
  %v176 = vsel %vm160, 1, 0
  %v177 = vsel %vm161, 1, 0
  %v178 = vsel %vm162, 1, 0
  %v179 = vsel %vm163, 1, 0
  %v180 = vsel %vm164, 1, 0
  %v181 = vsel %vm165, 1, 0
  %v182 = vsel %vm166, 1, 0
  %v183 = vcvt.s32.f32 %v167
  %v184 = vcvt.s32.f32 %v168
  %v185 = vcvt.s32.f32 %v169
  %v186 = vcvt.s32.f32 %v170
  %v187 = vcvt.s32.f32 %v171
  %v188 = vcvt.s32.f32 %v172
  %v189 = vcvt.s32.f32 %v173
  %v190 = vcvt.s32.f32 %v174
  %v191 = vcvt.s32.f32 %v175
  %v192 = vcvt.s32.f32 %v176
  %v193 = vcvt.s32.f32 %v177
  %v194 = vcvt.s32.f32 %v178
  %v195 = vcvt.s32.f32 %v179
  %v196 = vcvt.s32.f32 %v180
  %v197 = vcvt.s32.f32 %v181
  %v198 = vcvt.s32.f32 %v182
  %v199 = vld [vmem:[%s4] sm:$0xff]
  %v200 = vld [vmem:[%s4 + $0x8] sm:$0xff]
  %v201 = vld [vmem:[%s4 + $0x10] sm:$0xff]
  %v202 = vld [vmem:[%s4 + $0x18] sm:$0xff]
  %v203 = vld [vmem:[%s4 + $0x20] sm:$0xff]
  %v204 = vld [vmem:[%s4 + $0x28] sm:$0xff]
  %v205 = vld [vmem:[%s4 + $0x30] sm:$0xff]
  %v206 = vld [vmem:[%s4 + $0x38] sm:$0xff]
  %v207 = vld [vmem:[%s4 + $0x40] sm:$0xff]
  %v208 = vld [vmem:[%s4 + $0x48] sm:$0xff]
  %v209 = vld [vmem:[%s4 + $0x50] sm:$0xff]
  %v210 = vld [vmem:[%s4 + $0x58] sm:$0xff]
  %v211 = vld [vmem:[%s4 + $0x60] sm:$0xff]
  %v212 = vld [vmem:[%s4 + $0x68] sm:$0xff]
  %v213 = vld [vmem:[%s4 + $0x70] sm:$0xff]
  %v214 = vld [vmem:[%s4 + $0x78] sm:$0xff]
  %215 = vset.pattern.permute.xlu0 0
  %216 = vperm.xlu0 %215, %v199
  %v217 = vpop.permute.xlu0 %216
  %218 = vset.pattern.permute.xlu0 0
  %219 = vperm.xlu0 %218, %v200
  %v220 = vpop.permute.xlu0 %219
  %221 = vset.pattern.permute.xlu0 0
  %222 = vperm.xlu0 %221, %v201
  %v223 = vpop.permute.xlu0 %222
  %224 = vset.pattern.permute.xlu0 0
  %225 = vperm.xlu0 %224, %v202
  %v226 = vpop.permute.xlu0 %225
  %227 = vset.pattern.permute.xlu0 0
  %228 = vperm.xlu0 %227, %v203
  %v229 = vpop.permute.xlu0 %228
  %230 = vset.pattern.permute.xlu0 0
  %231 = vperm.xlu0 %230, %v204
  %v232 = vpop.permute.xlu0 %231
  %233 = vset.pattern.permute.xlu0 0
  %234 = vperm.xlu0 %233, %v205
  %v235 = vpop.permute.xlu0 %234
  %236 = vset.pattern.permute.xlu0 0
  %237 = vperm.xlu0 %236, %v206
  %v238 = vpop.permute.xlu0 %237
  %239 = vset.pattern.permute.xlu0 0
  %240 = vperm.xlu0 %239, %v207
  %v241 = vpop.permute.xlu0 %240
  %242 = vset.pattern.permute.xlu0 0
  %243 = vperm.xlu0 %242, %v208
  %v244 = vpop.permute.xlu0 %243
  %245 = vset.pattern.permute.xlu0 0
  %246 = vperm.xlu0 %245, %v209
  %v247 = vpop.permute.xlu0 %246
  %248 = vset.pattern.permute.xlu0 0
  %249 = vperm.xlu0 %248, %v210
  %v250 = vpop.permute.xlu0 %249
  %251 = vset.pattern.permute.xlu0 0
  %252 = vperm.xlu0 %251, %v211
  %v253 = vpop.permute.xlu0 %252
  %254 = vset.pattern.permute.xlu0 0
  %255 = vperm.xlu0 %254, %v212
  %v256 = vpop.permute.xlu0 %255
  %257 = vset.pattern.permute.xlu0 0
  %258 = vperm.xlu0 %257, %v213
  %v259 = vpop.permute.xlu0 %258
  %260 = vset.pattern.permute.xlu0 0
  %261 = vperm.xlu0 %260, %v214
  %v262 = vpop.permute.xlu0 %261
  %vm263 = vcmp.eq.s32.totalorder %v86, %v217
  %vm264 = vcmp.eq.s32.totalorder %v86, %v220
  %vm265 = vcmp.eq.s32.totalorder %v86, %v223
  %vm266 = vcmp.eq.s32.totalorder %v86, %v226
  %vm267 = vcmp.eq.s32.totalorder %v86, %v229
  %vm268 = vcmp.eq.s32.totalorder %v86, %v232
  %vm269 = vcmp.eq.s32.totalorder %v86, %v235
  %vm270 = vcmp.eq.s32.totalorder %v86, %v238
  %vm271 = vcmp.eq.s32.totalorder %v86, %v241
  %vm272 = vcmp.eq.s32.totalorder %v86, %v244
  %vm273 = vcmp.eq.s32.totalorder %v86, %v247
  %vm274 = vcmp.eq.s32.totalorder %v86, %v250
  %vm275 = vcmp.eq.s32.totalorder %v86, %v253
  %vm276 = vcmp.eq.s32.totalorder %v86, %v256
  %vm277 = vcmp.eq.s32.totalorder %v86, %v259
  %vm278 = vcmp.eq.s32.totalorder %v86, %v262
  %v279 = vsel %vm263, 1, 0
  %v280 = vsel %vm264, 1, 0
  %v281 = vsel %vm265, 1, 0
  %v282 = vsel %vm266, 1, 0
  %v283 = vsel %vm267, 1, 0
  %v284 = vsel %vm268, 1, 0
  %v285 = vsel %vm269, 1, 0
  %v286 = vsel %vm270, 1, 0
  %v287 = vsel %vm271, 1, 0
  %v288 = vsel %vm272, 1, 0
  %v289 = vsel %vm273, 1, 0
  %v290 = vsel %vm274, 1, 0
  %v291 = vsel %vm275, 1, 0
  %v292 = vsel %vm276, 1, 0
  %v293 = vsel %vm277, 1, 0
  %v294 = vsel %vm278, 1, 0
  %v295 = vcvt.s32.f32 %v279
  %v296 = vcvt.s32.f32 %v280
  %v297 = vcvt.s32.f32 %v281
  %v298 = vcvt.s32.f32 %v282
  %v299 = vcvt.s32.f32 %v283
  %v300 = vcvt.s32.f32 %v284
  %v301 = vcvt.s32.f32 %v285
  %v302 = vcvt.s32.f32 %v286
  %v303 = vcvt.s32.f32 %v287
  %v304 = vcvt.s32.f32 %v288
  %v305 = vcvt.s32.f32 %v289
  %v306 = vcvt.s32.f32 %v290
  %v307 = vcvt.s32.f32 %v291
  %v308 = vcvt.s32.f32 %v292
  %v309 = vcvt.s32.f32 %v293
  %v310 = vcvt.s32.f32 %v294
  %v311 = vlaneseq
  %v312 = vshrl.u32 %v311, 7
  %v313 = vadd.s32 %v312, 8
  %v314 = vadd.s32 %v312, 16
  %v315 = vadd.s32 %v312, 24
  %v316 = vadd.s32 %v312, 32
  %v317 = vadd.s32 %v312, 40
  %v318 = vadd.s32 %v312, 48
  %v319 = vadd.s32 %v312, 56
  %v320 = vld [vmem:[%s2] sm:$0x1]
  %v321 = vperm.slane %v320, 0
  %vm322 = vcmp.eq.s32.totalorder %v312, %v321
  %vm323 = vcmp.eq.s32.totalorder %v313, %v321
  %vm324 = vcmp.eq.s32.totalorder %v314, %v321
  %vm325 = vcmp.eq.s32.totalorder %v315, %v321
  %vm326 = vcmp.eq.s32.totalorder %v316, %v321
  %vm327 = vcmp.eq.s32.totalorder %v317, %v321
  %vm328 = vcmp.eq.s32.totalorder %v318, %v321
  %vm329 = vcmp.eq.s32.totalorder %v319, %v321
  %v330 = vsel %vm322, 1, 0
  %v331 = vsel %vm323, 1, 0
  %v332 = vsel %vm324, 1, 0
  %v333 = vsel %vm325, 1, 0
  %v334 = vsel %vm326, 1, 0
  %v335 = vsel %vm327, 1, 0
  %v336 = vsel %vm328, 1, 0
  %v337 = vsel %vm329, 1, 0
  %v338 = vcvt.s32.f32 %v330
  %v339 = vcvt.s32.f32 %v331
  %v340 = vcvt.s32.f32 %v332
  %v341 = vcvt.s32.f32 %v333
  %v342 = vcvt.s32.f32 %v334
  %v343 = vcvt.s32.f32 %v335
  %v344 = vcvt.s32.f32 %v336
  %v345 = vcvt.s32.f32 %v337
  %vm346 = vcmask 523264
  %v348 = vsel %vm346, %v183, 0
  %v351 = vsel %vm346, %v184, 0
  %v354 = vsel %vm346, %v185, 0
  %v357 = vsel %vm346, %v186, 0
  %v360 = vsel %vm346, %v187, 0
  %v363 = vsel %vm346, %v188, 0
  %v366 = vsel %vm346, %v189, 0
  %v369 = vsel %vm346, %v190, 0
  %v372 = vsel %vm346, %v191, 0
  %v375 = vsel %vm346, %v192, 0
  %v378 = vsel %vm346, %v193, 0
  %v381 = vsel %vm346, %v194, 0
  %v384 = vsel %vm346, %v195, 0
  %v387 = vsel %vm346, %v196, 0
  %v390 = vsel %vm346, %v197, 0
  %v393 = vsel %vm346, %v198, 0
  %395 = vmatpush.msra.mxu0 0.0
  %396 = vmatpush.msra.mxu0 0.0
  %397 = vmatpush.msra.mxu0 0.0
  %398 = vmatpush.msra.mxu0 0.0
  %399 = vmatpush.msra.mxu0 0.0
  %400 = vmatpush.msra.mxu0 0.0
  %401 = vmatpush.msra.mxu0 0.0
  %402 = vmatpush.msra.mxu0 0.0
  %403 = vmatpush.msra.mxu0 %v68
  %404 = vmatpush.msra.mxu0 %v67
  %405 = vmatpush.msra.mxu0 %v66
  %406 = vmatpush.msra.mxu0 %v65
  %407 = vmatpush.msra.mxu0 %v64
  %408 = vmatpush.msra.mxu0 %v63
  %409 = vmatpush.msra.mxu0 %v62
  %410 = vmatpush.msra.mxu0 %v61
  %411 = vmatmul.f32.gmra.mxu0 %v348
  %v412 = vpop.f32.mrf.mxu0
  %v413 = vadd.f32 0.0, %v412
  %414 = vmatmul.f32.gmra.mxu0 %v351
  %v415 = vpop.f32.mrf.mxu0
  %v416 = vadd.f32 0.0, %v415
  %417 = vmatmul.f32.gmra.mxu0 %v354
  %v418 = vpop.f32.mrf.mxu0
  %v419 = vadd.f32 0.0, %v418
  %420 = vmatmul.f32.gmra.mxu0 %v357
  %v421 = vpop.f32.mrf.mxu0
  %v422 = vadd.f32 0.0, %v421
  %423 = vmatmul.f32.gmra.mxu0 %v360
  %v424 = vpop.f32.mrf.mxu0
  %v425 = vadd.f32 0.0, %v424
  %426 = vmatmul.f32.gmra.mxu0 %v363
  %v427 = vpop.f32.mrf.mxu0
  %v428 = vadd.f32 0.0, %v427
  %429 = vmatmul.f32.gmra.mxu0 %v366
  %v430 = vpop.f32.mrf.mxu0
  %v431 = vadd.f32 0.0, %v430
  %432 = vmatmul.f32.gmra.mxu0 %v369
  %v433 = vpop.f32.mrf.mxu0
  %v434 = vadd.f32 0.0, %v433
  %435 = vmatmul.f32.gmra.mxu0 %v372
  %v436 = vpop.f32.mrf.mxu0
  %v437 = vadd.f32 0.0, %v436
  %438 = vmatmul.f32.gmra.mxu0 %v375
  %v439 = vpop.f32.mrf.mxu0
  %v440 = vadd.f32 0.0, %v439
  %441 = vmatmul.f32.gmra.mxu0 %v378
  %v442 = vpop.f32.mrf.mxu0
  %v443 = vadd.f32 0.0, %v442
  %444 = vmatmul.f32.gmra.mxu0 %v381
  %v445 = vpop.f32.mrf.mxu0
  %v446 = vadd.f32 0.0, %v445
  %447 = vmatmul.f32.gmra.mxu0 %v384
  %v448 = vpop.f32.mrf.mxu0
  %v449 = vadd.f32 0.0, %v448
  %450 = vmatmul.f32.gmra.mxu0 %v387
  %v451 = vpop.f32.mrf.mxu0
  %v452 = vadd.f32 0.0, %v451
  %453 = vmatmul.f32.gmra.mxu0 %v390
  %v454 = vpop.f32.mrf.mxu0
  %v455 = vadd.f32 0.0, %v454
  %456 = vmatmul.f32.gmra.mxu0 %v393
  %v457 = vpop.f32.mrf.mxu0
  %v458 = vadd.f32 0.0, %v457
  %459 = vdwg.mxu0
  %v461 = vsel %vm346, %v295, 0
  %v464 = vsel %vm346, %v296, 0
  %v467 = vsel %vm346, %v297, 0
  %v470 = vsel %vm346, %v298, 0
  %v473 = vsel %vm346, %v299, 0
  %v476 = vsel %vm346, %v300, 0
  %v479 = vsel %vm346, %v301, 0
  %v482 = vsel %vm346, %v302, 0
  %v485 = vsel %vm346, %v303, 0
  %v488 = vsel %vm346, %v304, 0
  %v491 = vsel %vm346, %v305, 0
  %v494 = vsel %vm346, %v306, 0
  %v497 = vsel %vm346, %v307, 0
  %v500 = vsel %vm346, %v308, 0
  %v503 = vsel %vm346, %v309, 0
  %v506 = vsel %vm346, %v310, 0
  %508 = vmatpush.msra.mxu0 0.0
  %509 = vmatpush.msra.mxu0 0.0
  %510 = vmatpush.msra.mxu0 0.0
  %511 = vmatpush.msra.mxu0 0.0
  %512 = vmatpush.msra.mxu0 0.0
  %513 = vmatpush.msra.mxu0 0.0
  %514 = vmatpush.msra.mxu0 0.0
  %515 = vmatpush.msra.mxu0 0.0
  %516 = vmatpush.msra.mxu0 %v68
  %517 = vmatpush.msra.mxu0 %v67
  %518 = vmatpush.msra.mxu0 %v66
  %519 = vmatpush.msra.mxu0 %v65
  %520 = vmatpush.msra.mxu0 %v64
  %521 = vmatpush.msra.mxu0 %v63
  %522 = vmatpush.msra.mxu0 %v62
  %523 = vmatpush.msra.mxu0 %v61
  %524 = vmatmul.f32.gmra.mxu0 %v461
  %v525 = vpop.f32.mrf.mxu0
  %v526 = vadd.f32 0.0, %v525
  %527 = vmatmul.f32.gmra.mxu0 %v464
  %v528 = vpop.f32.mrf.mxu0
  %v529 = vadd.f32 0.0, %v528
  %530 = vmatmul.f32.gmra.mxu0 %v467
  %v531 = vpop.f32.mrf.mxu0
  %v532 = vadd.f32 0.0, %v531
  %533 = vmatmul.f32.gmra.mxu0 %v470
  %v534 = vpop.f32.mrf.mxu0
  %v535 = vadd.f32 0.0, %v534
  %536 = vmatmul.f32.gmra.mxu0 %v473
  %v537 = vpop.f32.mrf.mxu0
  %v538 = vadd.f32 0.0, %v537
  %539 = vmatmul.f32.gmra.mxu0 %v476
  %v540 = vpop.f32.mrf.mxu0
  %v541 = vadd.f32 0.0, %v540
  %542 = vmatmul.f32.gmra.mxu0 %v479
  %v543 = vpop.f32.mrf.mxu0
  %v544 = vadd.f32 0.0, %v543
  %545 = vmatmul.f32.gmra.mxu0 %v482
  %v546 = vpop.f32.mrf.mxu0
  %v547 = vadd.f32 0.0, %v546
  %548 = vmatmul.f32.gmra.mxu0 %v485
  %v549 = vpop.f32.mrf.mxu0
  %v550 = vadd.f32 0.0, %v549
  %551 = vmatmul.f32.gmra.mxu0 %v488
  %v552 = vpop.f32.mrf.mxu0
  %v553 = vadd.f32 0.0, %v552
  %554 = vmatmul.f32.gmra.mxu0 %v491
  %v555 = vpop.f32.mrf.mxu0
  %v556 = vadd.f32 0.0, %v555
  %557 = vmatmul.f32.gmra.mxu0 %v494
  %v558 = vpop.f32.mrf.mxu0
  %v559 = vadd.f32 0.0, %v558
  %560 = vmatmul.f32.gmra.mxu0 %v497
  %v561 = vpop.f32.mrf.mxu0
  %v562 = vadd.f32 0.0, %v561
  %563 = vmatmul.f32.gmra.mxu0 %v500
  %v564 = vpop.f32.mrf.mxu0
  %v565 = vadd.f32 0.0, %v564
  %566 = vmatmul.f32.gmra.mxu0 %v503
  %v567 = vpop.f32.mrf.mxu0
  %v568 = vadd.f32 0.0, %v567
  %569 = vmatmul.f32.gmra.mxu0 %v506
  %v570 = vpop.f32.mrf.mxu0
  %v571 = vadd.f32 0.0, %v570
  %572 = vdwg.mxu0
  %v573 = vadd.f32 %v526, %v413
  %v574 = vadd.f32 %v529, %v416
  %v575 = vadd.f32 %v532, %v419
  %v576 = vadd.f32 %v535, %v422
  %v577 = vadd.f32 %v538, %v425
  %v578 = vadd.f32 %v541, %v428
  %v579 = vadd.f32 %v544, %v431
  %v580 = vadd.f32 %v547, %v434
  %v581 = vadd.f32 %v550, %v437
  %v582 = vadd.f32 %v553, %v440
  %v583 = vadd.f32 %v556, %v443
  %v584 = vadd.f32 %v559, %v446
  %v585 = vadd.f32 %v562, %v449
  %v586 = vadd.f32 %v565, %v452
  %v587 = vadd.f32 %v568, %v455
  %v588 = vadd.f32 %v571, %v458
  %v589 = vmul.f32 %v573, 0.5
  %v590 = vmul.f32 %v574, 0.5
  %v591 = vmul.f32 %v575, 0.5
  %v592 = vmul.f32 %v576, 0.5
  %v593 = vmul.f32 %v577, 0.5
  %v594 = vmul.f32 %v578, 0.5
  %v595 = vmul.f32 %v579, 0.5
  %v596 = vmul.f32 %v580, 0.5
  %v597 = vmul.f32 %v581, 0.5
  %v598 = vmul.f32 %v582, 0.5
  %v599 = vmul.f32 %v583, 0.5
  %v600 = vmul.f32 %v584, 0.5
  %v601 = vmul.f32 %v585, 0.5
  %v602 = vmul.f32 %v586, 0.5
  %v603 = vmul.f32 %v587, 0.5
  %v604 = vmul.f32 %v588, 0.5
  %v605 = vsub.f32 %v526, %v413
  %v606 = vsub.f32 %v529, %v416
  %v607 = vsub.f32 %v532, %v419
  %v608 = vsub.f32 %v535, %v422
  %v609 = vsub.f32 %v538, %v425
  %v610 = vsub.f32 %v541, %v428
  %v611 = vsub.f32 %v544, %v431
  %v612 = vsub.f32 %v547, %v434
  %v613 = vsub.f32 %v550, %v437
  %v614 = vsub.f32 %v553, %v440
  %v615 = vsub.f32 %v556, %v443
  %v616 = vsub.f32 %v559, %v446
  %v617 = vsub.f32 %v562, %v449
  %v618 = vsub.f32 %v565, %v452
  %v619 = vsub.f32 %v568, %v455
  %v620 = vsub.f32 %v571, %v458
  %v621 = vand.u32 2147483647, %v605
  %v622 = vand.u32 2147483647, %v606
  %v623 = vand.u32 2147483647, %v607
  %v624 = vand.u32 2147483647, %v608
  %v625 = vand.u32 2147483647, %v609
  %v626 = vand.u32 2147483647, %v610
  %v627 = vand.u32 2147483647, %v611
  %v628 = vand.u32 2147483647, %v612
  %v629 = vand.u32 2147483647, %v613
  %v630 = vand.u32 2147483647, %v614
  %v631 = vand.u32 2147483647, %v615
  %v632 = vand.u32 2147483647, %v616
  %v633 = vand.u32 2147483647, %v617
  %v634 = vand.u32 2147483647, %v618
  %v635 = vand.u32 2147483647, %v619
  %v636 = vand.u32 2147483647, %v620
  %v637 = vmul.f32 %v621, 0.5
  %v638 = vmul.f32 %v622, 0.5
  %v639 = vmul.f32 %v623, 0.5
  %v640 = vmul.f32 %v624, 0.5
  %v641 = vmul.f32 %v625, 0.5
  %v642 = vmul.f32 %v626, 0.5
  %v643 = vmul.f32 %v627, 0.5
  %v644 = vmul.f32 %v628, 0.5
  %v645 = vmul.f32 %v629, 0.5
  %v646 = vmul.f32 %v630, 0.5
  %v647 = vmul.f32 %v631, 0.5
  %v648 = vmul.f32 %v632, 0.5
  %v649 = vmul.f32 %v633, 0.5
  %v650 = vmul.f32 %v634, 0.5
  %v651 = vmul.f32 %v635, 0.5
  %v652 = vmul.f32 %v636, 0.5
  %v653 = vld [vmem:[%s5] sm:$0xff]
  %v654 = vld [vmem:[%s6] sm:$0xff]
  %vm655 = vcmask 64512
  %v657 = vsel %vm655, %v637, 0
  %v660 = vsel %vm655, %v638, 0
  %v663 = vsel %vm655, %v639, 0
  %v666 = vsel %vm655, %v640, 0
  %v669 = vsel %vm655, %v641, 0
  %v672 = vsel %vm655, %v642, 0
  %v675 = vsel %vm655, %v643, 0
  %v678 = vsel %vm655, %v644, 0
  %v681 = vsel %vm655, %v645, 0
  %v684 = vsel %vm655, %v646, 0
  %v687 = vsel %vm655, %v647, 0
  %v690 = vsel %vm655, %v648, 0
  %v693 = vsel %vm655, %v649, 0
  %v696 = vsel %vm655, %v650, 0
  %v699 = vsel %vm655, %v651, 0
  %v702 = vsel %vm655, %v652, 0
  %704 = vmatpush.msra.mxu0 0.0
  %705 = vmatpush.msra.mxu0 0.0
  %706 = vmatpush.msra.mxu0 0.0
  %707 = vmatpush.msra.mxu0 0.0
  %708 = vmatpush.msra.mxu0 0.0
  %709 = vmatpush.msra.mxu0 0.0
  %710 = vmatpush.msra.mxu0 0.0
  %711 = vmatpush.msra.mxu0 0.0
  %712 = vmatpush.msra.mxu0 0.0
  %713 = vmatpush.msra.mxu0 0.0
  %714 = vmatpush.msra.mxu0 0.0
  %715 = vmatpush.msra.mxu0 0.0
  %716 = vmatpush.msra.mxu0 0.0
  %717 = vmatpush.msra.mxu0 0.0
  %718 = vmatpush.msra.mxu0 0.0
  %719 = vmatpush.msra.mxu0 %v654
  %720 = vmatmul.f32.gmra.mxu0 %v657
  %v721 = vpop.f32.mrf.mxu0
  %v722 = vadd.f32 0.0, %v721
  %723 = vmatmul.f32.gmra.mxu0 %v660
  %v724 = vpop.f32.mrf.mxu0
  %v725 = vadd.f32 0.0, %v724
  %726 = vmatmul.f32.gmra.mxu0 %v663
  %v727 = vpop.f32.mrf.mxu0
  %v728 = vadd.f32 0.0, %v727
  %729 = vmatmul.f32.gmra.mxu0 %v666
  %v730 = vpop.f32.mrf.mxu0
  %v731 = vadd.f32 0.0, %v730
  %732 = vmatmul.f32.gmra.mxu0 %v669
  %v733 = vpop.f32.mrf.mxu0
  %v734 = vadd.f32 0.0, %v733
  %735 = vmatmul.f32.gmra.mxu0 %v672
  %v736 = vpop.f32.mrf.mxu0
  %v737 = vadd.f32 0.0, %v736
  %738 = vmatmul.f32.gmra.mxu0 %v675
  %v739 = vpop.f32.mrf.mxu0
  %v740 = vadd.f32 0.0, %v739
  %741 = vmatmul.f32.gmra.mxu0 %v678
  %v742 = vpop.f32.mrf.mxu0
  %v743 = vadd.f32 0.0, %v742
  %744 = vmatmul.f32.gmra.mxu0 %v681
  %v745 = vpop.f32.mrf.mxu0
  %v746 = vadd.f32 0.0, %v745
  %747 = vmatmul.f32.gmra.mxu0 %v684
  %v748 = vpop.f32.mrf.mxu0
  %v749 = vadd.f32 0.0, %v748
  %750 = vmatmul.f32.gmra.mxu0 %v687
  %v751 = vpop.f32.mrf.mxu0
  %v752 = vadd.f32 0.0, %v751
  %753 = vmatmul.f32.gmra.mxu0 %v690
  %v754 = vpop.f32.mrf.mxu0
  %v755 = vadd.f32 0.0, %v754
  %756 = vmatmul.f32.gmra.mxu0 %v693
  %v757 = vpop.f32.mrf.mxu0
  %v758 = vadd.f32 0.0, %v757
  %759 = vmatmul.f32.gmra.mxu0 %v696
  %v760 = vpop.f32.mrf.mxu0
  %v761 = vadd.f32 0.0, %v760
  %762 = vmatmul.f32.gmra.mxu0 %v699
  %v763 = vpop.f32.mrf.mxu0
  %v764 = vadd.f32 0.0, %v763
  %765 = vmatmul.f32.gmra.mxu0 %v702
  %v766 = vpop.f32.mrf.mxu0
  %v767 = vadd.f32 0.0, %v766
  %768 = vdwg.mxu0
  %v770 = vsel %vm655, %v589, 0
  %v773 = vsel %vm655, %v590, 0
  %v776 = vsel %vm655, %v591, 0
  %v779 = vsel %vm655, %v592, 0
  %v782 = vsel %vm655, %v593, 0
  %v785 = vsel %vm655, %v594, 0
  %v788 = vsel %vm655, %v595, 0
  %v791 = vsel %vm655, %v596, 0
  %v794 = vsel %vm655, %v597, 0
  %v797 = vsel %vm655, %v598, 0
  %v800 = vsel %vm655, %v599, 0
  %v803 = vsel %vm655, %v600, 0
  %v806 = vsel %vm655, %v601, 0
  %v809 = vsel %vm655, %v602, 0
  %v812 = vsel %vm655, %v603, 0
  %v815 = vsel %vm655, %v604, 0
  %817 = vmatpush.msra.mxu0 0.0
  %818 = vmatpush.msra.mxu0 0.0
  %819 = vmatpush.msra.mxu0 0.0
  %820 = vmatpush.msra.mxu0 0.0
  %821 = vmatpush.msra.mxu0 0.0
  %822 = vmatpush.msra.mxu0 0.0
  %823 = vmatpush.msra.mxu0 0.0
  %824 = vmatpush.msra.mxu0 0.0
  %825 = vmatpush.msra.mxu0 0.0
  %826 = vmatpush.msra.mxu0 0.0
  %827 = vmatpush.msra.mxu0 0.0
  %828 = vmatpush.msra.mxu0 0.0
  %829 = vmatpush.msra.mxu0 0.0
  %830 = vmatpush.msra.mxu0 0.0
  %831 = vmatpush.msra.mxu0 0.0
  %832 = vmatpush.msra.mxu0 %v653
  %833 = vmatmul.f32.gmra.mxu0 %v770
  %v834 = vpop.f32.mrf.mxu0
  %v835 = vadd.f32 %v722, %v834
  %836 = vmatmul.f32.gmra.mxu0 %v773
  %v837 = vpop.f32.mrf.mxu0
  %v838 = vadd.f32 %v725, %v837
  %839 = vmatmul.f32.gmra.mxu0 %v776
  %v840 = vpop.f32.mrf.mxu0
  %v841 = vadd.f32 %v728, %v840
  %842 = vmatmul.f32.gmra.mxu0 %v779
  %v843 = vpop.f32.mrf.mxu0
  %v844 = vadd.f32 %v731, %v843
  %845 = vmatmul.f32.gmra.mxu0 %v782
  %v846 = vpop.f32.mrf.mxu0
  %v847 = vadd.f32 %v734, %v846
  %848 = vmatmul.f32.gmra.mxu0 %v785
  %v849 = vpop.f32.mrf.mxu0
  %v850 = vadd.f32 %v737, %v849
  %851 = vmatmul.f32.gmra.mxu0 %v788
  %v852 = vpop.f32.mrf.mxu0
  %v853 = vadd.f32 %v740, %v852
  %854 = vmatmul.f32.gmra.mxu0 %v791
  %v855 = vpop.f32.mrf.mxu0
  %v856 = vadd.f32 %v743, %v855
  %857 = vmatmul.f32.gmra.mxu0 %v794
  %v858 = vpop.f32.mrf.mxu0
  %v859 = vadd.f32 %v746, %v858
  %860 = vmatmul.f32.gmra.mxu0 %v797
  %v861 = vpop.f32.mrf.mxu0
  %v862 = vadd.f32 %v749, %v861
  %863 = vmatmul.f32.gmra.mxu0 %v800
  %v864 = vpop.f32.mrf.mxu0
  %v865 = vadd.f32 %v752, %v864
  %866 = vmatmul.f32.gmra.mxu0 %v803
  %v867 = vpop.f32.mrf.mxu0
  %v868 = vadd.f32 %v755, %v867
  %869 = vmatmul.f32.gmra.mxu0 %v806
  %v870 = vpop.f32.mrf.mxu0
  %v871 = vadd.f32 %v758, %v870
  %872 = vmatmul.f32.gmra.mxu0 %v809
  %v873 = vpop.f32.mrf.mxu0
  %v874 = vadd.f32 %v761, %v873
  %875 = vmatmul.f32.gmra.mxu0 %v812
  %v876 = vpop.f32.mrf.mxu0
  %v877 = vadd.f32 %v764, %v876
  %878 = vmatmul.f32.gmra.mxu0 %v815
  %v879 = vpop.f32.mrf.mxu0
  %v880 = vadd.f32 %v767, %v879
  %881 = vdwg.mxu0
  %v882 = vld [vmem:[%s7] sm:$0xff]
  %v884 = vsel %vm655, %v69, 0
  %v887 = vsel %vm655, %v70, 0
  %v890 = vsel %vm655, %v71, 0
  %v893 = vsel %vm655, %v72, 0
  %v896 = vsel %vm655, %v73, 0
  %v899 = vsel %vm655, %v74, 0
  %v902 = vsel %vm655, %v75, 0
  %v905 = vsel %vm655, %v76, 0
  %v908 = vsel %vm655, %v77, 0
  %v911 = vsel %vm655, %v78, 0
  %v914 = vsel %vm655, %v79, 0
  %v917 = vsel %vm655, %v80, 0
  %v920 = vsel %vm655, %v81, 0
  %v923 = vsel %vm655, %v82, 0
  %v926 = vsel %vm655, %v83, 0
  %v929 = vsel %vm655, %v84, 0
  %931 = vmatpush.msra.mxu0 0.0
  %932 = vmatpush.msra.mxu0 0.0
  %933 = vmatpush.msra.mxu0 0.0
  %934 = vmatpush.msra.mxu0 0.0
  %935 = vmatpush.msra.mxu0 0.0
  %936 = vmatpush.msra.mxu0 0.0
  %937 = vmatpush.msra.mxu0 0.0
  %938 = vmatpush.msra.mxu0 0.0
  %939 = vmatpush.msra.mxu0 0.0
  %940 = vmatpush.msra.mxu0 0.0
  %941 = vmatpush.msra.mxu0 0.0
  %942 = vmatpush.msra.mxu0 0.0
  %943 = vmatpush.msra.mxu0 0.0
  %944 = vmatpush.msra.mxu0 0.0
  %945 = vmatpush.msra.mxu0 0.0
  %946 = vmatpush.msra.mxu0 %v882
  %947 = vmatmul.f32.gmra.mxu0 %v884
  %v948 = vpop.f32.mrf.mxu0
  %v949 = vadd.f32 0.0, %v948
  %950 = vmatmul.f32.gmra.mxu0 %v887
  %v951 = vpop.f32.mrf.mxu0
  %v952 = vadd.f32 0.0, %v951
  %953 = vmatmul.f32.gmra.mxu0 %v890
  %v954 = vpop.f32.mrf.mxu0
  %v955 = vadd.f32 0.0, %v954
  %956 = vmatmul.f32.gmra.mxu0 %v893
  %v957 = vpop.f32.mrf.mxu0
  %v958 = vadd.f32 0.0, %v957
  %959 = vmatmul.f32.gmra.mxu0 %v896
  %v960 = vpop.f32.mrf.mxu0
  %v961 = vadd.f32 0.0, %v960
  %962 = vmatmul.f32.gmra.mxu0 %v899
  %v963 = vpop.f32.mrf.mxu0
  %v964 = vadd.f32 0.0, %v963
  %965 = vmatmul.f32.gmra.mxu0 %v902
  %v966 = vpop.f32.mrf.mxu0
  %v967 = vadd.f32 0.0, %v966
  %968 = vmatmul.f32.gmra.mxu0 %v905
  %v969 = vpop.f32.mrf.mxu0
  %v970 = vadd.f32 0.0, %v969
  %971 = vmatmul.f32.gmra.mxu0 %v908
  %v972 = vpop.f32.mrf.mxu0
  %v973 = vadd.f32 0.0, %v972
  %974 = vmatmul.f32.gmra.mxu0 %v911
  %v975 = vpop.f32.mrf.mxu0
  %v976 = vadd.f32 0.0, %v975
  %977 = vmatmul.f32.gmra.mxu0 %v914
  %v978 = vpop.f32.mrf.mxu0
  %v979 = vadd.f32 0.0, %v978
  %980 = vmatmul.f32.gmra.mxu0 %v917
  %v981 = vpop.f32.mrf.mxu0
  %v982 = vadd.f32 0.0, %v981
  %983 = vmatmul.f32.gmra.mxu0 %v920
  %v984 = vpop.f32.mrf.mxu0
  %v985 = vadd.f32 0.0, %v984
  %986 = vmatmul.f32.gmra.mxu0 %v923
  %v987 = vpop.f32.mrf.mxu0
  %v988 = vadd.f32 0.0, %v987
  %989 = vmatmul.f32.gmra.mxu0 %v926
  %v990 = vpop.f32.mrf.mxu0
  %v991 = vadd.f32 0.0, %v990
  %992 = vmatmul.f32.gmra.mxu0 %v929
  %v993 = vpop.f32.mrf.mxu0
  %v994 = vadd.f32 0.0, %v993
  %995 = vdwg.mxu0
  %v996 = vadd.f32 %v835, %v949
  %v997 = vadd.f32 %v838, %v952
  %v998 = vadd.f32 %v841, %v955
  %v999 = vadd.f32 %v844, %v958
  %v1000 = vadd.f32 %v847, %v961
  %v1001 = vadd.f32 %v850, %v964
  %v1002 = vadd.f32 %v853, %v967
  %v1003 = vadd.f32 %v856, %v970
  %v1004 = vadd.f32 %v859, %v973
  %v1005 = vadd.f32 %v862, %v976
  %v1006 = vadd.f32 %v865, %v979
  %v1007 = vadd.f32 %v868, %v982
  %v1008 = vadd.f32 %v871, %v985
  %v1009 = vadd.f32 %v874, %v988
  %v1010 = vadd.f32 %v877, %v991
  %v1011 = vadd.f32 %v880, %v994
  %v1012 = vld [vmem:[%s8] sm:$0x1]
  %v1014 = vperm.slane %v1012, 0
  %v1016 = vadd.f32 %v996, %v1014
  %v1017 = vadd.f32 %v997, %v1014
  %v1018 = vadd.f32 %v998, %v1014
  %v1019 = vadd.f32 %v999, %v1014
  %v1020 = vadd.f32 %v1000, %v1014
  %v1021 = vadd.f32 %v1001, %v1014
  %v1022 = vadd.f32 %v1002, %v1014
  %v1023 = vadd.f32 %v1003, %v1014
  %v1024 = vadd.f32 %v1004, %v1014
  %v1025 = vadd.f32 %v1005, %v1014
  %v1026 = vadd.f32 %v1006, %v1014
  %v1027 = vadd.f32 %v1007, %v1014
  %v1028 = vadd.f32 %v1008, %v1014
  %v1029 = vadd.f32 %v1009, %v1014
  %v1030 = vadd.f32 %v1010, %v1014
  %v1031 = vadd.f32 %v1011, %v1014
  %v1032 = vmax.f32 %v1016, 0.0
  %v1033 = vmax.f32 %v1017, 0.0
  %v1034 = vmax.f32 %v1018, 0.0
  %v1035 = vmax.f32 %v1019, 0.0
  %v1036 = vmax.f32 %v1020, 0.0
  %v1037 = vmax.f32 %v1021, 0.0
  %v1038 = vmax.f32 %v1022, 0.0
  %v1039 = vmax.f32 %v1023, 0.0
  %v1040 = vmax.f32 %v1024, 0.0
  %v1041 = vmax.f32 %v1025, 0.0
  %v1042 = vmax.f32 %v1026, 0.0
  %v1043 = vmax.f32 %v1027, 0.0
  %v1044 = vmax.f32 %v1028, 0.0
  %v1045 = vmax.f32 %v1029, 0.0
  %v1046 = vmax.f32 %v1030, 0.0
  %v1047 = vmax.f32 %v1031, 0.0
  %v1048 = vld [vmem:[%s9] sm:$0xff]
  %v1049 = vld [vmem:[%s9 + $0x8] sm:$0xff]
  %v1050 = vld [vmem:[%s9 + $0x10] sm:$0xff]
  %v1051 = vld [vmem:[%s9 + $0x18] sm:$0xff]
  %v1052 = vld [vmem:[%s10] sm:$0x1]
  %v1054 = vperm.slane %v1052, 0
  %vm1056 = vcmask 261120
  %v1058 = vsel %vm1056, %v1032, 0
  %v1061 = vsel %vm1056, %v1033, 0
  %v1064 = vsel %vm1056, %v1034, 0
  %v1067 = vsel %vm1056, %v1035, 0
  %v1070 = vsel %vm1056, %v1036, 0
  %v1073 = vsel %vm1056, %v1037, 0
  %v1076 = vsel %vm1056, %v1038, 0
  %v1079 = vsel %vm1056, %v1039, 0
  %v1082 = vsel %vm1056, %v1040, 0
  %v1085 = vsel %vm1056, %v1041, 0
  %v1088 = vsel %vm1056, %v1042, 0
  %v1091 = vsel %vm1056, %v1043, 0
  %v1094 = vsel %vm1056, %v1044, 0
  %v1097 = vsel %vm1056, %v1045, 0
  %v1100 = vsel %vm1056, %v1046, 0
  %v1103 = vsel %vm1056, %v1047, 0
  %1105 = vmatpush.msra.mxu0 0.0
  %1106 = vmatpush.msra.mxu0 0.0
  %1107 = vmatpush.msra.mxu0 0.0
  %1108 = vmatpush.msra.mxu0 0.0
  %1109 = vmatpush.msra.mxu0 0.0
  %1110 = vmatpush.msra.mxu0 0.0
  %1111 = vmatpush.msra.mxu0 0.0
  %1112 = vmatpush.msra.mxu0 0.0
  %1113 = vmatpush.msra.mxu0 0.0
  %1114 = vmatpush.msra.mxu0 0.0
  %1115 = vmatpush.msra.mxu0 0.0
  %1116 = vmatpush.msra.mxu0 0.0
  %1117 = vmatpush.msra.mxu0 %v1051
  %1118 = vmatpush.msra.mxu0 %v1050
  %1119 = vmatpush.msra.mxu0 %v1049
  %1120 = vmatpush.msra.mxu0 %v1048
  %1121 = vmatmul.f32.gmra.mxu0 %v1058
  %v1122 = vpop.f32.mrf.mxu0
  %v1123 = vadd.f32 %v1054, %v1122
  %1124 = vmatmul.f32.gmra.mxu0 %v1061
  %v1125 = vpop.f32.mrf.mxu0
  %v1126 = vadd.f32 %v1054, %v1125
  %1127 = vmatmul.f32.gmra.mxu0 %v1064
  %v1128 = vpop.f32.mrf.mxu0
  %v1129 = vadd.f32 %v1054, %v1128
  %1130 = vmatmul.f32.gmra.mxu0 %v1067
  %v1131 = vpop.f32.mrf.mxu0
  %v1132 = vadd.f32 %v1054, %v1131
  %1133 = vmatmul.f32.gmra.mxu0 %v1070
  %v1134 = vpop.f32.mrf.mxu0
  %v1135 = vadd.f32 %v1054, %v1134
  %1136 = vmatmul.f32.gmra.mxu0 %v1073
  %v1137 = vpop.f32.mrf.mxu0
  %v1138 = vadd.f32 %v1054, %v1137
  %1139 = vmatmul.f32.gmra.mxu0 %v1076
  %v1140 = vpop.f32.mrf.mxu0
  %v1141 = vadd.f32 %v1054, %v1140
  %1142 = vmatmul.f32.gmra.mxu0 %v1079
  %v1143 = vpop.f32.mrf.mxu0
  %v1144 = vadd.f32 %v1054, %v1143
  %1145 = vmatmul.f32.gmra.mxu0 %v1082
  %v1146 = vpop.f32.mrf.mxu0
  %v1147 = vadd.f32 %v1054, %v1146
  %1148 = vmatmul.f32.gmra.mxu0 %v1085
  %v1149 = vpop.f32.mrf.mxu0
  %v1150 = vadd.f32 %v1054, %v1149
  %1151 = vmatmul.f32.gmra.mxu0 %v1088
  %v1152 = vpop.f32.mrf.mxu0
  %v1153 = vadd.f32 %v1054, %v1152
  %1154 = vmatmul.f32.gmra.mxu0 %v1091
  %v1155 = vpop.f32.mrf.mxu0
  %v1156 = vadd.f32 %v1054, %v1155
  %1157 = vmatmul.f32.gmra.mxu0 %v1094
  %v1158 = vpop.f32.mrf.mxu0
  %v1159 = vadd.f32 %v1054, %v1158
  %1160 = vmatmul.f32.gmra.mxu0 %v1097
  %v1161 = vpop.f32.mrf.mxu0
  %v1162 = vadd.f32 %v1054, %v1161
  %1163 = vmatmul.f32.gmra.mxu0 %v1100
  %v1164 = vpop.f32.mrf.mxu0
  %v1165 = vadd.f32 %v1054, %v1164
  %1166 = vmatmul.f32.gmra.mxu0 %v1103
  %v1167 = vpop.f32.mrf.mxu0
  %v1168 = vadd.f32 %v1054, %v1167
  %1169 = vdwg.mxu0
  %1170 = vmatpush.msra.mxu0 %v1168
  %1171 = vmatpush.msra.mxu0 %v1165
  %1172 = vmatpush.msra.mxu0 %v1162
  %1173 = vmatpush.msra.mxu0 %v1159
  %1174 = vmatpush.msra.mxu0 %v1156
  %1175 = vmatpush.msra.mxu0 %v1153
  %1176 = vmatpush.msra.mxu0 %v1150
  %1177 = vmatpush.msra.mxu0 %v1147
  %1178 = vmatpush.msra.mxu0 %v1144
  %1179 = vmatpush.msra.mxu0 %v1141
  %1180 = vmatpush.msra.mxu0 %v1138
  %1181 = vmatpush.msra.mxu0 %v1135
  %1182 = vmatpush.msra.mxu0 %v1132
  %1183 = vmatpush.msra.mxu0 %v1129
  %1184 = vmatpush.msra.mxu0 %v1126
  %1185 = vmatpush.msra.mxu0 %v1123
  %1186 = vmatmul.f32.gmra.mxu0 %v338
  %v1187 = vpop.f32.mrf.mxu0
  %v1188 = vadd.f32 0.0, %v1187
  %1189 = vmatmul.f32.gmra.mxu0 %v339
  %v1190 = vpop.f32.mrf.mxu0
  %v1191 = vadd.f32 0.0, %v1190
  %1192 = vmatmul.f32.gmra.mxu0 %v340
  %v1193 = vpop.f32.mrf.mxu0
  %v1194 = vadd.f32 0.0, %v1193
  %1195 = vmatmul.f32.gmra.mxu0 %v341
  %v1196 = vpop.f32.mrf.mxu0
  %v1197 = vadd.f32 0.0, %v1196
  %1198 = vmatmul.f32.gmra.mxu0 %v342
  %v1199 = vpop.f32.mrf.mxu0
  %v1200 = vadd.f32 0.0, %v1199
  %1201 = vmatmul.f32.gmra.mxu0 %v343
  %v1202 = vpop.f32.mrf.mxu0
  %v1203 = vadd.f32 0.0, %v1202
  %1204 = vmatmul.f32.gmra.mxu0 %v344
  %v1205 = vpop.f32.mrf.mxu0
  %v1206 = vadd.f32 0.0, %v1205
  %1207 = vmatmul.f32.gmra.mxu0 %v345
  %v1208 = vpop.f32.mrf.mxu0
  %v1209 = vadd.f32 0.0, %v1208
  %1210 = vdwg.mxu0
  %v1211 = vld [vmem:[%s11] sm:$0xff]
  %v1212 = vld [vmem:[%s12] sm:$0xff]
  %v1214 = vsel %vm655, %v1188, 0
  %v1217 = vsel %vm655, %v1191, 0
  %v1220 = vsel %vm655, %v1194, 0
  %v1223 = vsel %vm655, %v1197, 0
  %v1226 = vsel %vm655, %v1200, 0
  %v1229 = vsel %vm655, %v1203, 0
  %v1232 = vsel %vm655, %v1206, 0
  %v1235 = vsel %vm655, %v1209, 0
  %1237 = vmatpush.msra.mxu0 0.0
  %1238 = vmatpush.msra.mxu0 0.0
  %1239 = vmatpush.msra.mxu0 0.0
  %1240 = vmatpush.msra.mxu0 0.0
  %1241 = vmatpush.msra.mxu0 0.0
  %1242 = vmatpush.msra.mxu0 0.0
  %1243 = vmatpush.msra.mxu0 0.0
  %1244 = vmatpush.msra.mxu0 0.0
  %1245 = vmatpush.msra.mxu0 0.0
  %1246 = vmatpush.msra.mxu0 0.0
  %1247 = vmatpush.msra.mxu0 0.0
  %1248 = vmatpush.msra.mxu0 0.0
  %1249 = vmatpush.msra.mxu0 0.0
  %1250 = vmatpush.msra.mxu0 0.0
  %1251 = vmatpush.msra.mxu0 0.0
  %1252 = vmatpush.msra.mxu0 %v1212
  %1253 = vmatmul.f32.gmra.mxu0 %v1214
  %v1254 = vpop.f32.mrf.mxu0
  %v1255 = vadd.f32 0.0, %v1254
  %1256 = vmatmul.f32.gmra.mxu0 %v1217
  %v1257 = vpop.f32.mrf.mxu0
  %v1258 = vadd.f32 0.0, %v1257
  %1259 = vmatmul.f32.gmra.mxu0 %v1220
  %v1260 = vpop.f32.mrf.mxu0
  %v1261 = vadd.f32 0.0, %v1260
  %1262 = vmatmul.f32.gmra.mxu0 %v1223
  %v1263 = vpop.f32.mrf.mxu0
  %v1264 = vadd.f32 0.0, %v1263
  %1265 = vmatmul.f32.gmra.mxu0 %v1226
  %v1266 = vpop.f32.mrf.mxu0
  %v1267 = vadd.f32 0.0, %v1266
  %1268 = vmatmul.f32.gmra.mxu0 %v1229
  %v1269 = vpop.f32.mrf.mxu0
  %v1270 = vadd.f32 0.0, %v1269
  %1271 = vmatmul.f32.gmra.mxu0 %v1232
  %v1272 = vpop.f32.mrf.mxu0
  %v1273 = vadd.f32 0.0, %v1272
  %1274 = vmatmul.f32.gmra.mxu0 %v1235
  %v1275 = vpop.f32.mrf.mxu0
  %v1276 = vadd.f32 0.0, %v1275
  %1277 = vdwg.mxu0
  %v1279 = vsel %vm655, %v61, 0
  %v1282 = vsel %vm655, %v62, 0
  %v1285 = vsel %vm655, %v63, 0
  %v1288 = vsel %vm655, %v64, 0
  %v1291 = vsel %vm655, %v65, 0
  %v1294 = vsel %vm655, %v66, 0
  %v1297 = vsel %vm655, %v67, 0
  %v1300 = vsel %vm655, %v68, 0
  %1302 = vmatpush.msra.mxu0 0.0
  %1303 = vmatpush.msra.mxu0 0.0
  %1304 = vmatpush.msra.mxu0 0.0
  %1305 = vmatpush.msra.mxu0 0.0
  %1306 = vmatpush.msra.mxu0 0.0
  %1307 = vmatpush.msra.mxu0 0.0
  %1308 = vmatpush.msra.mxu0 0.0
  %1309 = vmatpush.msra.mxu0 0.0
  %1310 = vmatpush.msra.mxu0 0.0
  %1311 = vmatpush.msra.mxu0 0.0
  %1312 = vmatpush.msra.mxu0 0.0
  %1313 = vmatpush.msra.mxu0 0.0
  %1314 = vmatpush.msra.mxu0 0.0
  %1315 = vmatpush.msra.mxu0 0.0
  %1316 = vmatpush.msra.mxu0 0.0
  %1317 = vmatpush.msra.mxu0 %v1211
  %1318 = vmatmul.f32.gmra.mxu0 %v1279
  %v1319 = vpop.f32.mrf.mxu0
  %v1320 = vadd.f32 %v1255, %v1319
  %1321 = vmatmul.f32.gmra.mxu0 %v1282
  %v1322 = vpop.f32.mrf.mxu0
  %v1323 = vadd.f32 %v1258, %v1322
  %1324 = vmatmul.f32.gmra.mxu0 %v1285
  %v1325 = vpop.f32.mrf.mxu0
  %v1326 = vadd.f32 %v1261, %v1325
  %1327 = vmatmul.f32.gmra.mxu0 %v1288
  %v1328 = vpop.f32.mrf.mxu0
  %v1329 = vadd.f32 %v1264, %v1328
  %1330 = vmatmul.f32.gmra.mxu0 %v1291
  %v1331 = vpop.f32.mrf.mxu0
  %v1332 = vadd.f32 %v1267, %v1331
  %1333 = vmatmul.f32.gmra.mxu0 %v1294
  %v1334 = vpop.f32.mrf.mxu0
  %v1335 = vadd.f32 %v1270, %v1334
  %1336 = vmatmul.f32.gmra.mxu0 %v1297
  %v1337 = vpop.f32.mrf.mxu0
  %v1338 = vadd.f32 %v1273, %v1337
  %1339 = vmatmul.f32.gmra.mxu0 %v1300
  %v1340 = vpop.f32.mrf.mxu0
  %v1341 = vadd.f32 %v1276, %v1340
  %1342 = vdwg.mxu0
  %v1343 = vld [vmem:[%s13] sm:$0x1]
  %v1345 = vperm.slane %v1343, 0
  %v1347 = vadd.f32 %v1320, %v1345
  %v1348 = vadd.f32 %v1323, %v1345
  %v1349 = vadd.f32 %v1326, %v1345
  %v1350 = vadd.f32 %v1329, %v1345
  %v1351 = vadd.f32 %v1332, %v1345
  %v1352 = vadd.f32 %v1335, %v1345
  %v1353 = vadd.f32 %v1338, %v1345
  %v1354 = vadd.f32 %v1341, %v1345
  %v1355 = vmax.f32 %v1347, 0.0
  %v1356 = vmax.f32 %v1348, 0.0
  %v1357 = vmax.f32 %v1349, 0.0
  %v1358 = vmax.f32 %v1350, 0.0
  %v1359 = vmax.f32 %v1351, 0.0
  %v1360 = vmax.f32 %v1352, 0.0
  %v1361 = vmax.f32 %v1353, 0.0
  %v1362 = vmax.f32 %v1354, 0.0
  %v1363 = vld [vmem:[%s14] sm:$0xff]
  %v1364 = vld [vmem:[%s14 + $0x8] sm:$0xff]
  %v1365 = vld [vmem:[%s14 + $0x10] sm:$0xff]
  %v1366 = vld [vmem:[%s14 + $0x18] sm:$0xff]
  %v1367 = vld [vmem:[%s15] sm:$0x1]
  %v1369 = vperm.slane %v1367, 0
  %v1372 = vsel %vm1056, %v1355, 0
  %v1375 = vsel %vm1056, %v1356, 0
  %v1378 = vsel %vm1056, %v1357, 0
  %v1381 = vsel %vm1056, %v1358, 0
  %v1384 = vsel %vm1056, %v1359, 0
  %v1387 = vsel %vm1056, %v1360, 0
  %v1390 = vsel %vm1056, %v1361, 0
  %v1393 = vsel %vm1056, %v1362, 0
  %1395 = vmatpush.msra.mxu0 0.0
  %1396 = vmatpush.msra.mxu0 0.0
  %1397 = vmatpush.msra.mxu0 0.0
  %1398 = vmatpush.msra.mxu0 0.0
  %1399 = vmatpush.msra.mxu0 0.0
  %1400 = vmatpush.msra.mxu0 0.0
  %1401 = vmatpush.msra.mxu0 0.0
  %1402 = vmatpush.msra.mxu0 0.0
  %1403 = vmatpush.msra.mxu0 0.0
  %1404 = vmatpush.msra.mxu0 0.0
  %1405 = vmatpush.msra.mxu0 0.0
  %1406 = vmatpush.msra.mxu0 0.0
  %1407 = vmatpush.msra.mxu0 %v1366
  %1408 = vmatpush.msra.mxu0 %v1365
  %1409 = vmatpush.msra.mxu0 %v1364
  %1410 = vmatpush.msra.mxu0 %v1363
  %1411 = vmatmul.f32.gmra.mxu0 %v1372
  %v1412 = vpop.f32.mrf.mxu0
  %v1413 = vadd.f32 %v1369, %v1412
  %1414 = vmatmul.f32.gmra.mxu0 %v1375
  %v1415 = vpop.f32.mrf.mxu0
  %v1416 = vadd.f32 %v1369, %v1415
  %1417 = vmatmul.f32.gmra.mxu0 %v1378
  %v1418 = vpop.f32.mrf.mxu0
  %v1419 = vadd.f32 %v1369, %v1418
  %1420 = vmatmul.f32.gmra.mxu0 %v1381
  %v1421 = vpop.f32.mrf.mxu0
  %v1422 = vadd.f32 %v1369, %v1421
  %1423 = vmatmul.f32.gmra.mxu0 %v1384
  %v1424 = vpop.f32.mrf.mxu0
  %v1425 = vadd.f32 %v1369, %v1424
  %1426 = vmatmul.f32.gmra.mxu0 %v1387
  %v1427 = vpop.f32.mrf.mxu0
  %v1428 = vadd.f32 %v1369, %v1427
  %1429 = vmatmul.f32.gmra.mxu0 %v1390
  %v1430 = vpop.f32.mrf.mxu0
  %v1431 = vadd.f32 %v1369, %v1430
  %1432 = vmatmul.f32.gmra.mxu0 %v1393
  %v1433 = vpop.f32.mrf.mxu0
  %v1434 = vadd.f32 %v1369, %v1433
  %1435 = vdwg.mxu0
  %v1436 = vmax.f32 %v1413, 0.0
  %v1437 = vmax.f32 %v1416, 0.0
  %v1438 = vmax.f32 %v1419, 0.0
  %v1439 = vmax.f32 %v1422, 0.0
  %v1440 = vmax.f32 %v1425, 0.0
  %v1441 = vmax.f32 %v1428, 0.0
  %v1442 = vmax.f32 %v1431, 0.0
  %v1443 = vmax.f32 %v1434, 0.0
  %1444 = vmatpush.msra.mxu0 0.0
  %1445 = vmatpush.msra.mxu0 0.0
  %1446 = vmatpush.msra.mxu0 0.0
  %1447 = vmatpush.msra.mxu0 0.0
  %1448 = vmatpush.msra.mxu0 0.0
  %1449 = vmatpush.msra.mxu0 0.0
  %1450 = vmatpush.msra.mxu0 0.0
  %1451 = vmatpush.msra.mxu0 0.0
  %1452 = vmatpush.msra.mxu0 %v1443
  %1453 = vmatpush.msra.mxu0 %v1442
  %1454 = vmatpush.msra.mxu0 %v1441
  %1455 = vmatpush.msra.mxu0 %v1440
  %1456 = vmatpush.msra.mxu0 %v1439
  %1457 = vmatpush.msra.mxu0 %v1438
  %1458 = vmatpush.msra.mxu0 %v1437
  %1459 = vmatpush.msra.mxu0 %v1436
  %1460 = vmatmul.f32.gmra.mxu0 %v348
  %v1461 = vpop.f32.mrf.mxu0
  %v1462 = vadd.f32 0.0, %v1461
  %1463 = vmatmul.f32.gmra.mxu0 %v351
  %v1464 = vpop.f32.mrf.mxu0
  %v1465 = vadd.f32 0.0, %v1464
  %1466 = vmatmul.f32.gmra.mxu0 %v354
  %v1467 = vpop.f32.mrf.mxu0
  %v1468 = vadd.f32 0.0, %v1467
  %1469 = vmatmul.f32.gmra.mxu0 %v357
  %v1470 = vpop.f32.mrf.mxu0
  %v1471 = vadd.f32 0.0, %v1470
  %1472 = vmatmul.f32.gmra.mxu0 %v360
  %v1473 = vpop.f32.mrf.mxu0
  %v1474 = vadd.f32 0.0, %v1473
  %1475 = vmatmul.f32.gmra.mxu0 %v363
  %v1476 = vpop.f32.mrf.mxu0
  %v1477 = vadd.f32 0.0, %v1476
  %1478 = vmatmul.f32.gmra.mxu0 %v366
  %v1479 = vpop.f32.mrf.mxu0
  %v1480 = vadd.f32 0.0, %v1479
  %1481 = vmatmul.f32.gmra.mxu0 %v369
  %v1482 = vpop.f32.mrf.mxu0
  %v1483 = vadd.f32 0.0, %v1482
  %1484 = vmatmul.f32.gmra.mxu0 %v372
  %v1485 = vpop.f32.mrf.mxu0
  %v1486 = vadd.f32 0.0, %v1485
  %1487 = vmatmul.f32.gmra.mxu0 %v375
  %v1488 = vpop.f32.mrf.mxu0
  %v1489 = vadd.f32 0.0, %v1488
  %1490 = vmatmul.f32.gmra.mxu0 %v378
  %v1491 = vpop.f32.mrf.mxu0
  %v1492 = vadd.f32 0.0, %v1491
  %1493 = vmatmul.f32.gmra.mxu0 %v381
  %v1494 = vpop.f32.mrf.mxu0
  %v1495 = vadd.f32 0.0, %v1494
  %1496 = vmatmul.f32.gmra.mxu0 %v384
  %v1497 = vpop.f32.mrf.mxu0
  %v1498 = vadd.f32 0.0, %v1497
  %1499 = vmatmul.f32.gmra.mxu0 %v387
  %v1500 = vpop.f32.mrf.mxu0
  %v1501 = vadd.f32 0.0, %v1500
  %1502 = vmatmul.f32.gmra.mxu0 %v390
  %v1503 = vpop.f32.mrf.mxu0
  %v1504 = vadd.f32 0.0, %v1503
  %1505 = vmatmul.f32.gmra.mxu0 %v393
  %v1506 = vpop.f32.mrf.mxu0
  %v1507 = vadd.f32 0.0, %v1506
  %1508 = vdwg.mxu0
  %1509 = vmatpush.msra.mxu0 0.0
  %1510 = vmatpush.msra.mxu0 0.0
  %1511 = vmatpush.msra.mxu0 0.0
  %1512 = vmatpush.msra.mxu0 0.0
  %1513 = vmatpush.msra.mxu0 0.0
  %1514 = vmatpush.msra.mxu0 0.0
  %1515 = vmatpush.msra.mxu0 0.0
  %1516 = vmatpush.msra.mxu0 0.0
  %1517 = vmatpush.msra.mxu0 %v1443
  %1518 = vmatpush.msra.mxu0 %v1442
  %1519 = vmatpush.msra.mxu0 %v1441
  %1520 = vmatpush.msra.mxu0 %v1440
  %1521 = vmatpush.msra.mxu0 %v1439
  %1522 = vmatpush.msra.mxu0 %v1438
  %1523 = vmatpush.msra.mxu0 %v1437
  %1524 = vmatpush.msra.mxu0 %v1436
  %1525 = vmatmul.f32.gmra.mxu0 %v461
  %v1526 = vpop.f32.mrf.mxu0
  %v1527 = vadd.f32 %v1462, %v1526
  %1528 = vmatmul.f32.gmra.mxu0 %v464
  %v1529 = vpop.f32.mrf.mxu0
  %v1530 = vadd.f32 %v1465, %v1529
  %1531 = vmatmul.f32.gmra.mxu0 %v467
  %v1532 = vpop.f32.mrf.mxu0
  %v1533 = vadd.f32 %v1468, %v1532
  %1534 = vmatmul.f32.gmra.mxu0 %v470
  %v1535 = vpop.f32.mrf.mxu0
  %v1536 = vadd.f32 %v1471, %v1535
  %1537 = vmatmul.f32.gmra.mxu0 %v473
  %v1538 = vpop.f32.mrf.mxu0
  %v1539 = vadd.f32 %v1474, %v1538
  %1540 = vmatmul.f32.gmra.mxu0 %v476
  %v1541 = vpop.f32.mrf.mxu0
  %v1542 = vadd.f32 %v1477, %v1541
  %1543 = vmatmul.f32.gmra.mxu0 %v479
  %v1544 = vpop.f32.mrf.mxu0
  %v1545 = vadd.f32 %v1480, %v1544
  %1546 = vmatmul.f32.gmra.mxu0 %v482
  %v1547 = vpop.f32.mrf.mxu0
  %v1548 = vadd.f32 %v1483, %v1547
  %1549 = vmatmul.f32.gmra.mxu0 %v485
  %v1550 = vpop.f32.mrf.mxu0
  %v1551 = vadd.f32 %v1486, %v1550
  %1552 = vmatmul.f32.gmra.mxu0 %v488
  %v1553 = vpop.f32.mrf.mxu0
  %v1554 = vadd.f32 %v1489, %v1553
  %1555 = vmatmul.f32.gmra.mxu0 %v491
  %v1556 = vpop.f32.mrf.mxu0
  %v1557 = vadd.f32 %v1492, %v1556
  %1558 = vmatmul.f32.gmra.mxu0 %v494
  %v1559 = vpop.f32.mrf.mxu0
  %v1560 = vadd.f32 %v1495, %v1559
  %1561 = vmatmul.f32.gmra.mxu0 %v497
  %v1562 = vpop.f32.mrf.mxu0
  %v1563 = vadd.f32 %v1498, %v1562
  %1564 = vmatmul.f32.gmra.mxu0 %v500
  %v1565 = vpop.f32.mrf.mxu0
  %v1566 = vadd.f32 %v1501, %v1565
  %1567 = vmatmul.f32.gmra.mxu0 %v503
  %v1568 = vpop.f32.mrf.mxu0
  %v1569 = vadd.f32 %v1504, %v1568
  %1570 = vmatmul.f32.gmra.mxu0 %v506
  %v1571 = vpop.f32.mrf.mxu0
  %v1572 = vadd.f32 %v1507, %v1571
  %1573 = vdwg.mxu0
  %v1574 = vmul.f32 %v1527, 0.5
  %v1575 = vmul.f32 %v1530, 0.5
  %v1576 = vmul.f32 %v1533, 0.5
  %v1577 = vmul.f32 %v1536, 0.5
  %v1578 = vmul.f32 %v1539, 0.5
  %v1579 = vmul.f32 %v1542, 0.5
  %v1580 = vmul.f32 %v1545, 0.5
  %v1581 = vmul.f32 %v1548, 0.5
  %v1582 = vmul.f32 %v1551, 0.5
  %v1583 = vmul.f32 %v1554, 0.5
  %v1584 = vmul.f32 %v1557, 0.5
  %v1585 = vmul.f32 %v1560, 0.5
  %v1586 = vmul.f32 %v1563, 0.5
  %v1587 = vmul.f32 %v1566, 0.5
  %v1588 = vmul.f32 %v1569, 0.5
  %v1589 = vmul.f32 %v1572, 0.5
  %1590 = vst.msk [vmem:[%s19] sm:$0xff] %vm655, %v1574
  %1591 = vst.msk [vmem:[%s19 + $0x8] sm:$0xff] %vm655, %v1575
  %1592 = vst.msk [vmem:[%s19 + $0x10] sm:$0xff] %vm655, %v1576
  %1593 = vst.msk [vmem:[%s19 + $0x18] sm:$0xff] %vm655, %v1577
  %1594 = vst.msk [vmem:[%s19 + $0x20] sm:$0xff] %vm655, %v1578
  %1595 = vst.msk [vmem:[%s19 + $0x28] sm:$0xff] %vm655, %v1579
  %1596 = vst.msk [vmem:[%s19 + $0x30] sm:$0xff] %vm655, %v1580
  %1597 = vst.msk [vmem:[%s19 + $0x38] sm:$0xff] %vm655, %v1581
  %1598 = vst.msk [vmem:[%s19 + $0x40] sm:$0xff] %vm655, %v1582
  %1599 = vst.msk [vmem:[%s19 + $0x48] sm:$0xff] %vm655, %v1583
  %1600 = vst.msk [vmem:[%s19 + $0x50] sm:$0xff] %vm655, %v1584
  %1601 = vst.msk [vmem:[%s19 + $0x58] sm:$0xff] %vm655, %v1585
  %1602 = vst.msk [vmem:[%s19 + $0x60] sm:$0xff] %vm655, %v1586
  %1603 = vst.msk [vmem:[%s19 + $0x68] sm:$0xff] %vm655, %v1587
  %1604 = vst.msk [vmem:[%s19 + $0x70] sm:$0xff] %vm655, %v1588
  %1605 = vst.msk [vmem:[%s19 + $0x78] sm:$0xff] %vm655, %v1589
  %1606 = vmatpush.msra.mxu0 %v1589
  %1607 = vmatpush.msra.mxu0 %v1588
  %1608 = vmatpush.msra.mxu0 %v1587
  %1609 = vmatpush.msra.mxu0 %v1586
  %1610 = vmatpush.msra.mxu0 %v1585
  %1611 = vmatpush.msra.mxu0 %v1584
  %1612 = vmatpush.msra.mxu0 %v1583
  %1613 = vmatpush.msra.mxu0 %v1582
  %1614 = vmatpush.msra.mxu0 %v1581
  %1615 = vmatpush.msra.mxu0 %v1580
  %1616 = vmatpush.msra.mxu0 %v1579
  %1617 = vmatpush.msra.mxu0 %v1578
  %1618 = vmatpush.msra.mxu0 %v1577
  %1619 = vmatpush.msra.mxu0 %v1576
  %1620 = vmatpush.msra.mxu0 %v1575
  %1621 = vmatpush.msra.mxu0 %v1574
  %1622 = vmatmul.f32.gmra.mxu0 %v338
  %v1623 = vpop.f32.mrf.mxu0
  %v1624 = vadd.f32 0.0, %v1623
  %1625 = vmatmul.f32.gmra.mxu0 %v339
  %v1626 = vpop.f32.mrf.mxu0
  %v1627 = vadd.f32 0.0, %v1626
  %1628 = vmatmul.f32.gmra.mxu0 %v340
  %v1629 = vpop.f32.mrf.mxu0
  %v1630 = vadd.f32 0.0, %v1629
  %1631 = vmatmul.f32.gmra.mxu0 %v341
  %v1632 = vpop.f32.mrf.mxu0
  %v1633 = vadd.f32 0.0, %v1632
  %1634 = vmatmul.f32.gmra.mxu0 %v342
  %v1635 = vpop.f32.mrf.mxu0
  %v1636 = vadd.f32 0.0, %v1635
  %1637 = vmatmul.f32.gmra.mxu0 %v343
  %v1638 = vpop.f32.mrf.mxu0
  %v1639 = vadd.f32 0.0, %v1638
  %1640 = vmatmul.f32.gmra.mxu0 %v344
  %v1641 = vpop.f32.mrf.mxu0
  %v1642 = vadd.f32 0.0, %v1641
  %1643 = vmatmul.f32.gmra.mxu0 %v345
  %v1644 = vpop.f32.mrf.mxu0
  %v1645 = vadd.f32 0.0, %v1644
  %1646 = vdwg.mxu0
  %1647 = vadd.xlane.f32.xlu0 %v338
  %v1648 = vpop.xlane.xlu0 %1647
  %1649 = vadd.xlane.f32.xlu0 %v339
  %v1650 = vpop.xlane.xlu0 %1649
  %1651 = vadd.xlane.f32.xlu0 %v340
  %v1652 = vpop.xlane.xlu0 %1651
  %1653 = vadd.xlane.f32.xlu0 %v341
  %v1654 = vpop.xlane.xlu0 %1653
  %1655 = vadd.xlane.f32.xlu0 %v342
  %v1656 = vpop.xlane.xlu0 %1655
  %1657 = vadd.xlane.f32.xlu0 %v343
  %v1658 = vpop.xlane.xlu0 %1657
  %1659 = vadd.xlane.f32.xlu0 %v344
  %v1660 = vpop.xlane.xlu0 %1659
  %1661 = vadd.xlane.f32.xlu0 %v345
  %v1662 = vpop.xlane.xlu0 %1661
  %v1663 = vmax.f32 %v1648, 1.0
  %v1664 = vmax.f32 %v1650, 1.0
  %v1665 = vmax.f32 %v1652, 1.0
  %v1666 = vmax.f32 %v1654, 1.0
  %v1667 = vmax.f32 %v1656, 1.0
  %v1668 = vmax.f32 %v1658, 1.0
  %v1669 = vmax.f32 %v1660, 1.0
  %v1670 = vmax.f32 %v1662, 1.0
  %v1671 = vrcp.pop %v1663
  %v1672 = vmul.f32 %v1663, %v1671
  %v1673 = vsub.f32 1.0, %v1672
  %v1674 = vmul.f32 %v1671, %v1673
  %v1675 = vadd.f32 %v1671, %v1674
  %vm1676 = vweird.f32 %v1663
  %vm1677 = vweird.f32 %v1671
  %vm1678 = vmor %vm1676, %vm1677
  %v1679 = vsel %vm1678, %v1671, %v1675
  %v1680 = vand.u32 2147483647, %v1663
  %vm1681 = vcmp.eq.f32.partialorder %v1680, 8.507059e+37
  %v1682 = vand.u32 %v1663, 2147483648
  %v1683 = vor.u32 1.1754944e-38, %v1682
  %v1684 = vsel %vm1681, %v1683, %v1679
  %v1685 = vmul.f32 %v1624, %v1684
  %v1686 = vrcp.pop %v1664
  %v1687 = vmul.f32 %v1664, %v1686
  %v1688 = vsub.f32 1.0, %v1687
  %v1689 = vmul.f32 %v1686, %v1688
  %v1690 = vadd.f32 %v1686, %v1689
  %vm1691 = vweird.f32 %v1664
  %vm1692 = vweird.f32 %v1686
  %vm1693 = vmor %vm1691, %vm1692
  %v1694 = vsel %vm1693, %v1686, %v1690
  %v1695 = vand.u32 2147483647, %v1664
  %vm1696 = vcmp.eq.f32.partialorder %v1695, 8.507059e+37
  %v1697 = vand.u32 %v1664, 2147483648
  %v1698 = vor.u32 1.1754944e-38, %v1697
  %v1699 = vsel %vm1696, %v1698, %v1694
  %v1700 = vmul.f32 %v1627, %v1699
  %v1701 = vrcp.pop %v1665
  %v1702 = vmul.f32 %v1665, %v1701
  %v1703 = vsub.f32 1.0, %v1702
  %v1704 = vmul.f32 %v1701, %v1703
  %v1705 = vadd.f32 %v1701, %v1704
  %vm1706 = vweird.f32 %v1665
  %vm1707 = vweird.f32 %v1701
  %vm1708 = vmor %vm1706, %vm1707
  %v1709 = vsel %vm1708, %v1701, %v1705
  %v1710 = vand.u32 2147483647, %v1665
  %vm1711 = vcmp.eq.f32.partialorder %v1710, 8.507059e+37
  %v1712 = vand.u32 %v1665, 2147483648
  %v1713 = vor.u32 1.1754944e-38, %v1712
  %v1714 = vsel %vm1711, %v1713, %v1709
  %v1715 = vmul.f32 %v1630, %v1714
  %v1716 = vrcp.pop %v1666
  %v1717 = vmul.f32 %v1666, %v1716
  %v1718 = vsub.f32 1.0, %v1717
  %v1719 = vmul.f32 %v1716, %v1718
  %v1720 = vadd.f32 %v1716, %v1719
  %vm1721 = vweird.f32 %v1666
  %vm1722 = vweird.f32 %v1716
  %vm1723 = vmor %vm1721, %vm1722
  %v1724 = vsel %vm1723, %v1716, %v1720
  %v1725 = vand.u32 2147483647, %v1666
  %vm1726 = vcmp.eq.f32.partialorder %v1725, 8.507059e+37
  %v1727 = vand.u32 %v1666, 2147483648
  %v1728 = vor.u32 1.1754944e-38, %v1727
  %v1729 = vsel %vm1726, %v1728, %v1724
  %v1730 = vmul.f32 %v1633, %v1729
  %v1731 = vrcp.pop %v1667
  %v1732 = vmul.f32 %v1667, %v1731
  %v1733 = vsub.f32 1.0, %v1732
  %v1734 = vmul.f32 %v1731, %v1733
  %v1735 = vadd.f32 %v1731, %v1734
  %vm1736 = vweird.f32 %v1667
  %vm1737 = vweird.f32 %v1731
  %vm1738 = vmor %vm1736, %vm1737
  %v1739 = vsel %vm1738, %v1731, %v1735
  %v1740 = vand.u32 2147483647, %v1667
  %vm1741 = vcmp.eq.f32.partialorder %v1740, 8.507059e+37
  %v1742 = vand.u32 %v1667, 2147483648
  %v1743 = vor.u32 1.1754944e-38, %v1742
  %v1744 = vsel %vm1741, %v1743, %v1739
  %v1745 = vmul.f32 %v1636, %v1744
  %v1746 = vrcp.pop %v1668
  %v1747 = vmul.f32 %v1668, %v1746
  %v1748 = vsub.f32 1.0, %v1747
  %v1749 = vmul.f32 %v1746, %v1748
  %v1750 = vadd.f32 %v1746, %v1749
  %vm1751 = vweird.f32 %v1668
  %vm1752 = vweird.f32 %v1746
  %vm1753 = vmor %vm1751, %vm1752
  %v1754 = vsel %vm1753, %v1746, %v1750
  %v1755 = vand.u32 2147483647, %v1668
  %vm1756 = vcmp.eq.f32.partialorder %v1755, 8.507059e+37
  %v1757 = vand.u32 %v1668, 2147483648
  %v1758 = vor.u32 1.1754944e-38, %v1757
  %v1759 = vsel %vm1756, %v1758, %v1754
  %v1760 = vmul.f32 %v1639, %v1759
  %v1761 = vrcp.pop %v1669
  %v1762 = vmul.f32 %v1669, %v1761
  %v1763 = vsub.f32 1.0, %v1762
  %v1764 = vmul.f32 %v1761, %v1763
  %v1765 = vadd.f32 %v1761, %v1764
  %vm1766 = vweird.f32 %v1669
  %vm1767 = vweird.f32 %v1761
  %vm1768 = vmor %vm1766, %vm1767
  %v1769 = vsel %vm1768, %v1761, %v1765
  %v1770 = vand.u32 2147483647, %v1669
  %vm1771 = vcmp.eq.f32.partialorder %v1770, 8.507059e+37
  %v1772 = vand.u32 %v1669, 2147483648
  %v1773 = vor.u32 1.1754944e-38, %v1772
  %v1774 = vsel %vm1771, %v1773, %v1769
  %v1775 = vmul.f32 %v1642, %v1774
  %v1776 = vrcp.pop %v1670
  %v1777 = vmul.f32 %v1670, %v1776
  %v1778 = vsub.f32 1.0, %v1777
  %v1779 = vmul.f32 %v1776, %v1778
  %v1780 = vadd.f32 %v1776, %v1779
  %vm1781 = vweird.f32 %v1670
  %vm1782 = vweird.f32 %v1776
  %vm1783 = vmor %vm1781, %vm1782
  %v1784 = vsel %vm1783, %v1776, %v1780
  %v1785 = vand.u32 2147483647, %v1670
  %vm1786 = vcmp.eq.f32.partialorder %v1785, 8.507059e+37
  %v1787 = vand.u32 %v1670, 2147483648
  %v1788 = vor.u32 1.1754944e-38, %v1787
  %v1789 = vsel %vm1786, %v1788, %v1784
  %v1790 = vmul.f32 %v1645, %v1789
  %v1791 = vsel %vm655, %v1685, 0.0
  %v1792 = vsel %vm655, %v1700, 0.0
  %v1793 = vadd.f32 %v1791, %v1792
  %v1794 = vsel %vm655, %v1715, 0.0
  %v1795 = vadd.f32 %v1793, %v1794
  %v1796 = vsel %vm655, %v1730, 0.0
  %v1797 = vadd.f32 %v1795, %v1796
  %v1798 = vsel %vm655, %v1745, 0.0
  %v1799 = vadd.f32 %v1797, %v1798
  %v1800 = vsel %vm655, %v1760, 0.0
  %v1801 = vadd.f32 %v1799, %v1800
  %v1802 = vsel %vm655, %v1775, 0.0
  %v1803 = vadd.f32 %v1801, %v1802
  %v1804 = vsel %vm655, %v1790, 0.0
  %v1805 = vadd.f32 %v1803, %v1804
  %v1806 = vrot.slane %v1805, 4
  %v1807 = vadd.f32 %v1805, %v1806
  %v1808 = vrot.slane %v1807, 2
  %v1809 = vadd.f32 %v1807, %v1808
  %v1810 = vrot.slane %v1809, 1
  %v1811 = vadd.f32 %v1809, %v1810
  %v1812 = vrcp.pop 64.0
  %v1813 = vmul.f32 64.0, %v1812
  %v1814 = vsub.f32 1.0, %v1813
  %v1815 = vmul.f32 %v1812, %v1814
  %v1816 = vadd.f32 %v1812, %v1815
  %vm1817 = vweird.f32 %v1812
  %v1818 = vsel %vm1817, %v1812, %v1816
  %v1819 = vmul.f32 %v1811, %v1818
  %v1820 = vmul.f32 %v1685, %v1685
  %v1821 = vmul.f32 %v1700, %v1700
  %v1822 = vmul.f32 %v1715, %v1715
  %v1823 = vmul.f32 %v1730, %v1730
  %v1824 = vmul.f32 %v1745, %v1745
  %v1825 = vmul.f32 %v1760, %v1760
  %v1826 = vmul.f32 %v1775, %v1775
  %v1827 = vmul.f32 %v1790, %v1790
  %v1828 = vsel %vm655, %v1820, 0.0
  %v1829 = vsel %vm655, %v1821, 0.0
  %v1830 = vadd.f32 %v1828, %v1829
  %v1831 = vsel %vm655, %v1822, 0.0
  %v1832 = vadd.f32 %v1830, %v1831
  %v1833 = vsel %vm655, %v1823, 0.0
  %v1834 = vadd.f32 %v1832, %v1833
  %v1835 = vsel %vm655, %v1824, 0.0
  %v1836 = vadd.f32 %v1834, %v1835
  %v1837 = vsel %vm655, %v1825, 0.0
  %v1838 = vadd.f32 %v1836, %v1837
  %v1839 = vsel %vm655, %v1826, 0.0
  %v1840 = vadd.f32 %v1838, %v1839
  %v1841 = vsel %vm655, %v1827, 0.0
  %v1842 = vadd.f32 %v1840, %v1841
  %v1843 = vrot.slane %v1842, 4
  %v1844 = vadd.f32 %v1842, %v1843
  %v1845 = vrot.slane %v1844, 2
  %v1846 = vadd.f32 %v1844, %v1845
  %v1847 = vrot.slane %v1846, 1
  %v1848 = vadd.f32 %v1846, %v1847
  %v1849 = vmul.f32 %v1848, %v1818
  %v1850 = vmul.f32 %v1819, %v1819
  %v1851 = vsub.f32 %v1849, %v1850
  %v1852 = vadd.f32 %v1851, 1e-05
  %v1853 = vrsqrt.pop %v1852
  %v1854 = vmul.f32 %v1853, %v1852
  %v1855 = vmul.f32 %v1854, %v1853
  %v1856 = vmul.f32 0.5, %v1855
  %v1857 = vsub.f32 1.5, %v1856
  %v1858 = vmul.f32 %v1853, %v1857
  %vm1859 = vweird.f32 %v1852
  %vm1860 = vweird.f32 %v1853
  %vm1861 = vmor %vm1859, %vm1860
  %v1862 = vsel %vm1861, %v1853, %v1858
  %v1863 = vsub.f32 %v1685, %v1819
  %v1864 = vsub.f32 %v1700, %v1819
  %v1865 = vsub.f32 %v1715, %v1819
  %v1866 = vsub.f32 %v1730, %v1819
  %v1867 = vsub.f32 %v1745, %v1819
  %v1868 = vsub.f32 %v1760, %v1819
  %v1869 = vsub.f32 %v1775, %v1819
  %v1870 = vsub.f32 %v1790, %v1819
  %v1871 = vmul.f32 %v1863, %v1862
  %v1872 = vmul.f32 %v1864, %v1862
  %v1873 = vmul.f32 %v1865, %v1862
  %v1874 = vmul.f32 %v1866, %v1862
  %v1875 = vmul.f32 %v1867, %v1862
  %v1876 = vmul.f32 %v1868, %v1862
  %v1877 = vmul.f32 %v1869, %v1862
  %v1878 = vmul.f32 %v1870, %v1862
  %v1879 = vld [vmem:[%s16] sm:$0x1]
  %v1881 = vperm.slane %v1879, 0
  %v1883 = vmul.f32 %v1871, %v1881
  %v1884 = vmul.f32 %v1872, %v1881
  %v1885 = vmul.f32 %v1873, %v1881
  %v1886 = vmul.f32 %v1874, %v1881
  %v1887 = vmul.f32 %v1875, %v1881
  %v1888 = vmul.f32 %v1876, %v1881
  %v1889 = vmul.f32 %v1877, %v1881
  %v1890 = vmul.f32 %v1878, %v1881
  %v1891 = vld [vmem:[%s17] sm:$0x1]
  %v1893 = vperm.slane %v1891, 0
  %v1895 = vadd.f32 %v1883, %v1893
  %v1896 = vadd.f32 %v1884, %v1893
  %v1897 = vadd.f32 %v1885, %v1893
  %v1898 = vadd.f32 %v1886, %v1893
  %v1899 = vadd.f32 %v1887, %v1893
  %v1900 = vadd.f32 %v1888, %v1893
  %v1901 = vadd.f32 %v1889, %v1893
  %v1902 = vadd.f32 %v1890, %v1893
  %1903 = vst.msk [vmem:[%s18] sm:$0xff] %vm655, %v1895
  %1904 = vst.msk [vmem:[%s18 + $0x8] sm:$0xff] %vm655, %v1896
  %1905 = vst.msk [vmem:[%s18 + $0x10] sm:$0xff] %vm655, %v1897
  %1906 = vst.msk [vmem:[%s18 + $0x18] sm:$0xff] %vm655, %v1898
  %1907 = vst.msk [vmem:[%s18 + $0x20] sm:$0xff] %vm655, %v1899
  %1908 = vst.msk [vmem:[%s18 + $0x28] sm:$0xff] %vm655, %v1900
  %1909 = vst.msk [vmem:[%s18 + $0x30] sm:$0xff] %vm655, %v1901
  %1910 = vst.msk [vmem:[%s18 + $0x38] sm:$0xff] %vm655, %v1902
  // Predicated region
  $region74: #{flow_gnn_bn_block.1} parent=0 // pred_check
    _
  $region75: #{flow_gnn_bn_block.1} parent=0 // pred_check_branch
    %1912 = sbr.rel (0) target = $region77
  $region76: #{flow_gnn_bn_block.1} parent=0 // pred_region
    _
  $region77: #{flow_gnn_bn_block.1} parent=0 // pred_fallthru
    _
  // Predicated region
  $region78: #{flow_gnn_bn_block.1} parent=0 // pred_check
    _
  $region79: #{flow_gnn_bn_block.1} parent=0 // pred_check_branch
    %1914 = sbr.rel (0) target = $region81
  $region80: #{flow_gnn_bn_block.1} parent=0 // pred_region
    _
  $region81: #{flow_gnn_bn_block.1} parent=0 // pred_fallthru
    _
  // Predicated region
  $region82: #{flow_gnn_bn_block.1} parent=0 // pred_check
    _
  $region83: #{flow_gnn_bn_block.1} parent=0 // pred_check_branch
    %1916 = sbr.rel (0) target = $region85
  $region84: #{flow_gnn_bn_block.1} parent=0 // pred_region
    _
  $region85: #{flow_gnn_bn_block.1} parent=0 // pred_fallthru
    _
  // Predicated region
  $region86: #{flow_gnn_bn_block.1} parent=0 // pred_check
    _
  $region87: #{flow_gnn_bn_block.1} parent=0 // pred_check_branch
    %1918 = sbr.rel (0) target = $region89
  $region88: #{flow_gnn_bn_block.1} parent=0 // pred_region
    _
  $region89: #{flow_gnn_bn_block.1} parent=0 // pred_fallthru
    _

</llo_original>
